<compile_context>
chip_gen: v5e
topology: v5e:2x2
jax: 0.10.0
libtpu: 0.0.40
codegen_flags: <defaults>
</compile_context>

<pallas_src>
import math

import jax
import jax.numpy as jnp
from jax import lax
from jax.experimental import pallas as pl
from jax.experimental.pallas import tpu as pltpu

LN_EPS = 1e-5  # torch.nn.LayerNorm default


def _erf(x):
    # Abramowitz & Stegun 7.1.26 polynomial (|err| < 1.5e-7) -- exact-GELU semantics
    # without relying on an erf primitive lowering inside Mosaic.
    a1, a2, a3, a4, a5 = (0.254829592, -0.284496736, 1.421413741,
                          -1.453152027, 1.061405429)
    p = 0.3275911
    ax = jnp.abs(x)
    t = 1.0 / (1.0 + p * ax)
    poly = ((((a5 * t + a4) * t + a3) * t + a2) * t + a1) * t
    y = 1.0 - poly * jnp.exp(-ax * ax)
    return jnp.where(x >= 0, y, -y)


def _gelu(x):
    # config.hidden_act assumed "gelu" (exact, erf-based, as in HF ACT2FN["gelu"]).
    # TODO(synk): if the VALU becomes the binding slot after the bf16 MXU switch,
    # move this to a tanh/EUP-based approximation (config permitting).
    return 0.5 * x * (1.0 + _erf(x * (1.0 / math.sqrt(2.0))))


def _make_decoder_kernel(H, num_heads, mask_value, mxu_dtype):
    d = H // num_heads

    def kernel(x_ref, mem_ref, tmask_ref, mmask_ref,
               gamma_ref, beta_ref,
               wqkv_ref, bqkv_ref,
               wq_ca_ref, bq_ca_ref, wkv_ca_ref, bkv_ca_ref,
               wi_ref, bi_ref, wo_ref, bo_ref,
               o_ref, ctx_ref):
        x = x_ref[0]             # (S, H) f32
        mem = mem_ref[0]         # (S_mem, H) mxu_dtype (pre-cast in wrapper)
        gamma = gamma_ref[...]   # (1, H) f32
        beta = beta_ref[...]     # (1, H) f32

        # int8 masks, compares hoisted out of the per-head loops (once per step).
        keep_self = tmask_ref[0] != 0     # (S, S) bool  (True = keep score)
        keep_cross = mmask_ref[0] != 0    # (S, S_mem) bool

        def ln(t):
            mu = jnp.mean(t, axis=-1, keepdims=True)
            c = t - mu
            var = jnp.mean(c * c, axis=-1, keepdims=True)
            return c * lax.rsqrt(var + LN_EPS) * gamma + beta

        def mha(q, k, v, keep):
            # q: (Sq, H) f32, k/v: (Skv, H) f32, keep: (Sq, Skv) bool.
            # The 1/sqrt(d) score scale is already folded into the query weights.
            # Per-head contexts are written straight into the (S, H) VMEM scratch
            # (no jnp.concatenate lane-copy chain).
            # TODO(synk): batch heads in one lax.dot_general at production d (>=64).
            for h in range(num_heads):
                lo = h * d
                qh = q[:, lo:lo + d].astype(mxu_dtype)
                kh = k[:, lo:lo + d].astype(mxu_dtype)
                vh = v[:, lo:lo + d].astype(mxu_dtype)
                # NT matmul via dot_general -> no materialized transpose of kh.
                s = lax.dot_general(qh, kh, (((1,), (1,)), ((), ())),
                                    preferred_element_type=jnp.float32)
                # masked_fill(mask == 0, mask_value) -- fills with 1e-9, exactly as
                # in the PyTorch reference (intentionally NOT -inf).
                s = jnp.where(keep, s, jnp.float32(mask_value))
                m = jnp.max(s, axis=-1, keepdims=True)
                e = jnp.exp(s - m)
                # Exact division (no approx EUP reciprocal) to keep numerics tight.
                p = e / jnp.sum(e, axis=-1, keepdims=True)
                # dropout(attention_probs): identity in eval; head_mask: None.
                ctx_ref[:, lo:lo + d] = jnp.dot(
                    p.astype(mxu_dtype), vh, preferred_element_type=jnp.float32)
            return ctx_ref[...]

        # ---- self attention (on LN(x)) -----------------------------------
        x_ln = ln(x)
        qkv = jnp.dot(x_ln.astype(mxu_dtype), wqkv_ref[...],
                      preferred_element_type=jnp.float32) + bqkv_ref[...]
        ctx_sa = mha(qkv[:, :H], qkv[:, H:2 * H], qkv[:, 2 * H:], keep_self)
        h_sa = ln(ctx_sa + x)

        # ---- cross attention (query = LN(h_sa), key = value = memory) ----
        q_ca = jnp.dot(ln(h_sa).astype(mxu_dtype), wq_ca_ref[...],
                       preferred_element_type=jnp.float32) + bq_ca_ref[...]
        kv_ca = jnp.dot(mem, wkv_ca_ref[...],
                        preferred_element_type=jnp.float32) + bkv_ca_ref[...]
        ctx_ca = mha(q_ca, kv_ca[:, :H], kv_ca[:, H:], keep_cross)
        h_ca = ln(ctx_ca + h_sa)

        # ---- MLP: intermediate (GELU) + output dense + residual ----------
        inter = _gelu(jnp.dot(h_ca.astype(mxu_dtype), wi_ref[...],
                              preferred_element_type=jnp.float32) + bi_ref[...])
        out = h_ca + jnp.dot(inter.astype(mxu_dtype), wo_ref[...],
                             preferred_element_type=jnp.float32) + bo_ref[...]

        # One full-width store of the layer output (no per-head partial writes).
        o_ref[0] = out.astype(o_ref.dtype)

    return kernel


def pack_decoder_params(params, matmul_dtype=jnp.bfloat16):
    """One-time weight packing (call at weight-load time, NOT per decode step).

    Fuses the self-attn QKV and cross-attn KV projections, folds the 1/sqrt(d)
    attention scale into the query weights, and casts the matmul weights to the
    MXU dtype (bf16 by default). Biases / LayerNorm params stay f32.
    """
    H = params["sa_wq"].shape[0]
    I = params["wi"].shape[1]
    num_heads = params["num_heads"]
    d = H // num_heads
    scale = 1.0 / math.sqrt(d)

    wqkv = jnp.concatenate(
        [params["sa_wq"] * scale, params["sa_wk"], params["sa_wv"]], axis=1)
    bqkv = jnp.concatenate(
        [params["sa_bq"] * scale, params["sa_bk"], params["sa_bv"]]).reshape(1, 3 * H)
    wq_ca = params["ca_wq"] * scale
    bq_ca = (params["ca_bq"] * scale).reshape(1, H)
    wkv_ca = jnp.concatenate([params["ca_wk"], params["ca_wv"]], axis=1)
    bkv_ca = jnp.concatenate([params["ca_bk"], params["ca_bv"]]).reshape(1, 2 * H)

    return {
        "num_heads": num_heads,
        "gamma": params["ln_gamma"].reshape(1, H).astype(jnp.float32),
        "beta": params["ln_beta"].reshape(1, H).astype(jnp.float32),
        "wqkv": wqkv.astype(matmul_dtype), "bqkv": bqkv.astype(jnp.float32),
        "wq_ca": wq_ca.astype(matmul_dtype), "bq_ca": bq_ca.astype(jnp.float32),
        "wkv_ca": wkv_ca.astype(matmul_dtype), "bkv_ca": bkv_ca.astype(jnp.float32),
        "wi": params["wi"].astype(matmul_dtype), "bi": params["bi"].reshape(1, I).astype(jnp.float32),
        "wo": params["wo"].astype(matmul_dtype), "bo": params["bo"].reshape(1, H).astype(jnp.float32),
    }


def _vmem_limit_bytes(S, S_mem, H, I, num_heads, mdt):
    """Explicit scoped-VMEM budget: 2x (double-buffered) resident blocks plus a
    generous allowance for in-kernel intermediates, capped under the v7x ceiling."""
    f32 = 4
    w = jnp.dtype(mdt).itemsize
    blocks = (S * H * f32 + S_mem * H * w            # x, memory
              + S * S + S * S_mem                    # int8 masks
              + 2 * H * f32                          # gamma, beta
              + H * 3 * H * w + 3 * H * f32          # fused QKV
              + H * H * w + H * f32                  # cross Q
              + H * 2 * H * w + 2 * H * f32          # fused cross KV
              + H * I * w + I * f32                  # intermediate dense
              + I * H * w + H * f32                  # output dense
              + S * H * f32)                         # output block
    inter = f32 * (S * (3 * H + 2 * H + I + 8 * H)
                   + num_heads * S * max(S, S_mem)
                   + S * H)                          # ctx scratch
    est = 2 * blocks + 2 * inter
    return int(min(max(est, 16 << 20), 60 << 20))


def simvlm_decoder_layer(x, memory, memory_mask, tgt_mask, packed, *,
                         mask_value=1e-9):
    """x: (B, S, H); memory: (B, S_mem, H); memory_mask: (B, S, S_mem);
    tgt_mask: (B, S, S). Mask semantics: value == 0 -> score filled with mask_value.
    `packed` is the output of pack_decoder_params()."""
    B, S, H = x.shape
    S_mem = memory.shape[1]
    I = packed["wi"].shape[1]
    num_heads = packed["num_heads"]
    mxu_dtype = packed["wqkv"].dtype
    assert H % num_heads == 0

    # int8 masks: 4x less DMA/VMEM than f32 masks (callers can pass int8 directly).
    tmask_i8 = (tgt_mask != 0).astype(jnp.int8)
    mmask_i8 = (memory_mask != 0).astype(jnp.int8)
    # memory only feeds matmuls -> cast once in the wrapper (halves its DMA in bf16).
    mem_cast = memory.astype(mxu_dtype)

    kernel = _make_decoder_kernel(H, num_heads, mask_value, mxu_dtype)

    def full2d(shape):
        return pl.BlockSpec(shape, lambda b: (0, 0))

    out = pl.pallas_call(
        kernel,
        out_shape=jax.ShapeDtypeStruct((B, S, H), x.dtype),
        grid_spec=pltpu.PrefetchScalarGridSpec(
            num_scalar_prefetch=0,
            grid=(B,),
            in_specs=[
                pl.BlockSpec((1, S, H), lambda b: (b, 0, 0)),       # x
                pl.BlockSpec((1, S_mem, H), lambda b: (b, 0, 0)),   # memory
                pl.BlockSpec((1, S, S), lambda b: (b, 0, 0)),       # tgt_mask (i8)
                pl.BlockSpec((1, S, S_mem), lambda b: (b, 0, 0)),   # memory_mask (i8)
                full2d((1, H)), full2d((1, H)),                     # LN gamma / beta
                full2d((H, 3 * H)), full2d((1, 3 * H)),             # fused self-attn QKV
                full2d((H, H)), full2d((1, H)),                     # cross-attn Q
                full2d((H, 2 * H)), full2d((1, 2 * H)),             # fused cross-attn KV
                full2d((H, I)), full2d((1, I)),                     # intermediate dense
                full2d((I, H)), full2d((1, H)),                     # output dense
            ],
            out_specs=pl.BlockSpec((1, S, H), lambda b: (b, 0, 0)),
            scratch_shapes=[pltpu.VMEM((S, H), jnp.float32)],       # per-head ctx slab
        ),
        compiler_params=pltpu.CompilerParams(
            dimension_semantics=("parallel",),
            vmem_limit_bytes=_vmem_limit_bytes(S, S_mem, H, I, num_heads, mxu_dtype)),
    )(x, mem_cast, tmask_i8, mmask_i8,
      packed["gamma"], packed["beta"],
      packed["wqkv"], packed["bqkv"],
      packed["wq_ca"], packed["bq_ca"], packed["wkv_ca"], packed["bkv_ca"],
      packed["wi"], packed["bi"], packed["wo"], packed["bo"])
    return out


# ---------------------------------------------------------------------------
# Pure-JAX f32 reference mirroring the PyTorch forward (raw, un-fused params).
# ---------------------------------------------------------------------------
def _reference(x, memory, memory_mask, tgt_mask, params, *, num_heads,
               mask_value=1e-9):
    B, S, H = x.shape
    d = H // num_heads

    def ln(t):
        mu = t.mean(-1, keepdims=True)
        var = ((t - mu) ** 2).mean(-1, keepdims=True)
        return (t - mu) / jnp.sqrt(var + LN_EPS) * params["ln_gamma"] + params["ln_beta"]

    def attn(q_in, kv_in, mask, wq, bq, wk, bk, wv, bv):
        Sq = q_in.shape[1]

        def split(t):
            return t.reshape(B, -1, num_heads, d).transpose(0, 2, 1, 3)

        q = split(q_in @ wq + bq)
        k = split(kv_in @ wk + bk)
        v = split(kv_in @ wv + bv)
        s = jnp.einsum("bhqd,bhkd->bhqk", q, k) / math.sqrt(d)
        s = jnp.where(mask[:, None, :, :] == 0, mask_value, s)
        p = jax.nn.softmax(s, axis=-1)
        c = jnp.einsum("bhqk,bhkd->bhqd", p, v)
        return c.transpose(0, 2, 1, 3).reshape(B, Sq, H)

    x_ln = ln(x)
    sa = attn(x_ln, x_ln, tgt_mask,
              params["sa_wq"], params["sa_bq"], params["sa_wk"],
              params["sa_bk"], params["sa_wv"], params["sa_bv"])
    h_sa = ln(sa + x)
    ca = attn(ln(h_sa), memory, memory_mask,
              params["ca_wq"], params["ca_bq"], params["ca_wk"],
              params["ca_bk"], params["ca_wv"], params["ca_bv"])
    h_ca = ln(ca + h_sa)
    inter = jax.nn.gelu(h_ca @ params["wi"] + params["bi"], approximate=False)
    return h_ca + inter @ params["wo"] + params["bo"]


if __name__ == "__main__":
    # Small config consistent with the module: hidden=32, heads=4, seq=8, mem_seq=16.
    # NOTE: do not draw perf conclusions at this shape (H=32 -> 32-lane masked stores,
    # grid of 2 steps dominated by fixed overhead); validate perf at H = k*128.
    B, S, S_MEM, H, NH, I = 2, 8, 16, 32, 4, 64

    key = jax.random.PRNGKey(0)
    ks = jax.random.split(key, 24)

    x = jax.random.normal(ks[0], (B, S, H), jnp.float32)
    memory = jax.random.normal(ks[1], (B, S_MEM, H), jnp.float32)  # memory.last_hidden_state
    # Causal target mask and a random memory (padding) mask; 0 == masked position.
    tgt_mask = jnp.broadcast_to(
        jnp.tril(jnp.ones((S, S), jnp.float32)), (B, S, S))
    memory_mask = (jax.random.uniform(ks[2], (B, S, S_MEM)) > 0.2).astype(jnp.float32)

    w_scale = 1.0 / math.sqrt(H)
    def w(k, shape):  # dense weight, (in, out) layout
        return jax.random.normal(k, shape, jnp.float32) * w_scale
    def b(k, n):
        return jax.random.normal(k, (n,), jnp.float32) * 0.01

    params = {
        "num_heads": NH,
        # self attention
        "sa_wq": w(ks[3], (H, H)), "sa_bq": b(ks[4], H),
        "sa_wk": w(ks[5], (H, H)), "sa_bk": b(ks[6], H),
        "sa_wv": w(ks[7], (H, H)), "sa_bv": b(ks[8], H),
        # cross attention
        "ca_wq": w(ks[9], (H, H)), "ca_bq": b(ks[10], H),
        "ca_wk": w(ks[11], (H, H)), "ca_bk": b(ks[12], H),
        "ca_wv": w(ks[13], (H, H)), "ca_bv": b(ks[14], H),
        # shared LayerNorm
        "ln_gamma": 1.0 + 0.05 * jax.random.normal(ks[15], (H,), jnp.float32),
        "ln_beta": 0.05 * jax.random.normal(ks[16], (H,), jnp.float32),
        # intermediate + output
        "wi": w(ks[17], (H, I)), "bi": b(ks[18], I),
        "wo": jax.random.normal(ks[19], (I, H), jnp.float32) / math.sqrt(I),
        "bo": b(ks[20], H),
    }

    ref = _reference(x, memory, memory_mask, tgt_mask, params, num_heads=NH)

    # 1) Exact-math check: f32 MXU operands, exact softmax division -> tight match.
    packed_f32 = pack_decoder_params(params, matmul_dtype=jnp.float32)
    out_f32 = simvlm_decoder_layer(x, memory, memory_mask, tgt_mask, packed_f32)
    out_f32 = jax.block_until_ready(out_f32)
    assert out_f32.shape == (B, S, H)
    err_f32 = float(jnp.max(jnp.abs(out_f32 - ref)))
    assert err_f32 < 1e-3, f"f32 kernel mismatch vs reference: max abs err {err_f32}"

    # 2) Performance configuration: bf16 MXU operands (weights pre-cast once, activations
    #    cast at each dot), f32 accumulation / elementwise. Tolerance sized for the
    #    8-bit bf16 mantissa on the matmul operands.
    packed_bf16 = pack_decoder_params(params, matmul_dtype=jnp.bfloat16)
    out_bf16 = simvlm_decoder_layer(x, memory, memory_mask, tgt_mask, packed_bf16)
    out_bf16 = jax.block_until_ready(out_bf16)
    assert out_bf16.shape == (B, S, H)
    err_bf16 = float(jnp.max(jnp.abs(out_bf16 - ref)))
    assert err_bf16 < 5e-2, f"bf16 kernel mismatch vs reference: max abs err {err_bf16}"

    # TODO(synk): attention-probs / hidden dropout are identity in eval mode; a
    # training-mode kernel would need pltpu.prng_seed / pltpu.stateful_bernoulli.
    print("KERNEL_OK")
</pallas_src>

<mosaic_0001>
module attributes {stable_mosaic.version = 11 : i64} {
  func.func @kernel(%arg0: i32, %arg1: memref<1x8x32xf32, #tpu.memory_space<vmem>>, %arg2: memref<1x16x32xf32, #tpu.memory_space<vmem>>, %arg3: memref<1x8x8xi8, #tpu.memory_space<vmem>>, %arg4: memref<1x8x16xi8, #tpu.memory_space<vmem>>, %arg5: memref<1x32xf32, #tpu.memory_space<vmem>>, %arg6: memref<1x32xf32, #tpu.memory_space<vmem>>, %arg7: memref<32x96xf32, #tpu.memory_space<vmem>>, %arg8: memref<1x96xf32, #tpu.memory_space<vmem>>, %arg9: memref<32x32xf32, #tpu.memory_space<vmem>>, %arg10: memref<1x32xf32, #tpu.memory_space<vmem>>, %arg11: memref<32x64xf32, #tpu.memory_space<vmem>>, %arg12: memref<1x64xf32, #tpu.memory_space<vmem>>, %arg13: memref<32x64xf32, #tpu.memory_space<vmem>>, %arg14: memref<1x64xf32, #tpu.memory_space<vmem>>, %arg15: memref<64x32xf32, #tpu.memory_space<vmem>>, %arg16: memref<1x32xf32, #tpu.memory_space<vmem>>, %arg17: memref<1x8x32xf32, #tpu.memory_space<vmem>>, %arg18: memref<8x32xf32, #tpu.memory_space<vmem>>) attributes {dimension_semantics = [#tpu.dimension_semantics<parallel>], iteration_bounds = array<i64: 2>, scalar_prefetch = 0 : i64, scratch_operands = 1 : i64, tpu.core_type = #tpu.core_type<tc>, window_params = [{transform_indices = @transform_0, window_bounds = array<i64: 1, 8, 32>}, {transform_indices = @transform_1, window_bounds = array<i64: 1, 16, 32>}, {transform_indices = @transform_2, window_bounds = array<i64: 1, 8, 8>}, {transform_indices = @transform_3, window_bounds = array<i64: 1, 8, 16>}, {pipeline_mode = #tpu.pipeline_mode<synchronous>, transform_indices = @transform_4, window_bounds = array<i64: 1, 32>}, {pipeline_mode = #tpu.pipeline_mode<synchronous>, transform_indices = @transform_5, window_bounds = array<i64: 1, 32>}, {pipeline_mode = #tpu.pipeline_mode<synchronous>, transform_indices = @transform_6, window_bounds = array<i64: 32, 96>}, {pipeline_mode = #tpu.pipeline_mode<synchronous>, transform_indices = @transform_7, window_bounds = array<i64: 1, 96>}, {pipeline_mode = #tpu.pipeline_mode<synchronous>, transform_indices = @transform_8, window_bounds = array<i64: 32, 32>}, {pipeline_mode = #tpu.pipeline_mode<synchronous>, transform_indices = @transform_9, window_bounds = array<i64: 1, 32>}, {pipeline_mode = #tpu.pipeline_mode<synchronous>, transform_indices = @transform_10, window_bounds = array<i64: 32, 64>}, {pipeline_mode = #tpu.pipeline_mode<synchronous>, transform_indices = @transform_11, window_bounds = array<i64: 1, 64>}, {pipeline_mode = #tpu.pipeline_mode<synchronous>, transform_indices = @transform_12, window_bounds = array<i64: 32, 64>}, {pipeline_mode = #tpu.pipeline_mode<synchronous>, transform_indices = @transform_13, window_bounds = array<i64: 1, 64>}, {pipeline_mode = #tpu.pipeline_mode<synchronous>, transform_indices = @transform_14, window_bounds = array<i64: 64, 32>}, {pipeline_mode = #tpu.pipeline_mode<synchronous>, transform_indices = @transform_15, window_bounds = array<i64: 1, 32>}, {transform_indices = @transform_16, window_bounds = array<i64: 1, 8, 32>}]} {
    %c0 = arith.constant 0 : index
    %c0_0 = arith.constant 0 : index
    %c0_1 = arith.constant 0 : index
    %0 = vector.load %arg1[%c0, %c0_0, %c0_1] : memref<1x8x32xf32, #tpu.memory_space<vmem>>, vector<1x8x32xf32>
    %1 = vector.shape_cast %0 : vector<1x8x32xf32> to vector<8x32xf32>
    %c0_2 = arith.constant 0 : index
    %c0_3 = arith.constant 0 : index
    %c0_4 = arith.constant 0 : index
    %2 = vector.load %arg2[%c0_2, %c0_3, %c0_4] : memref<1x16x32xf32, #tpu.memory_space<vmem>>, vector<1x16x32xf32>
    %3 = vector.shape_cast %2 : vector<1x16x32xf32> to vector<16x32xf32>
    %c0_5 = arith.constant 0 : index
    %c0_6 = arith.constant 0 : index
    %4 = vector.load %arg5[%c0_5, %c0_6] : memref<1x32xf32, #tpu.memory_space<vmem>>, vector<1x32xf32>
    %c0_7 = arith.constant 0 : index
    %c0_8 = arith.constant 0 : index
    %5 = vector.load %arg6[%c0_7, %c0_8] : memref<1x32xf32, #tpu.memory_space<vmem>>, vector<1x32xf32>
    %c0_9 = arith.constant 0 : index
    %c0_10 = arith.constant 0 : index
    %c0_11 = arith.constant 0 : index
    %6 = vector.load %arg3[%c0_9, %c0_10, %c0_11] : memref<1x8x8xi8, #tpu.memory_space<vmem>>, vector<1x8x8xi8>
    %7 = vector.shape_cast %6 : vector<1x8x8xi8> to vector<8x8xi8>
    %c0_i8 = arith.constant 0 : i8
    %8 = vector.broadcast %c0_i8 : i8 to vector<8x8xi8>
    %9 = arith.cmpi ne, %7, %8 : vector<8x8xi8>
    %c0_12 = arith.constant 0 : index
    %c0_13 = arith.constant 0 : index
    %c0_14 = arith.constant 0 : index
    %10 = vector.load %arg4[%c0_12, %c0_13, %c0_14] : memref<1x8x16xi8, #tpu.memory_space<vmem>>, vector<1x8x16xi8>
    %11 = vector.shape_cast %10 : vector<1x8x16xi8> to vector<8x16xi8>
    %c0_i8_15 = arith.constant 0 : i8
    %12 = vector.broadcast %c0_i8_15 : i8 to vector<8x16xi8>
    %13 = arith.cmpi ne, %11, %12 : vector<8x16xi8>
    %cst = arith.constant dense<0.000000e+00> : vector<8xf32>
    %14 = vector.multi_reduction <add>, %1, %cst [1] : vector<8x32xf32> to vector<8xf32>
    %15 = vector.shape_cast %14 : vector<8xf32> to vector<8x1xf32>
    %cst_16 = arith.constant 3.200000e+01 : f32
    %16 = vector.broadcast %cst_16 : f32 to vector<8x1xf32>
    %17 = arith.divf %15, %16 : vector<8x1xf32>
    %18 = vector.broadcast %17 : vector<8x1xf32> to vector<8x32xf32>
    %19 = arith.subf %1, %18 : vector<8x32xf32>
    %20 = arith.mulf %19, %19 : vector<8x32xf32>
    %cst_17 = arith.constant dense<0.000000e+00> : vector<8xf32>
    %21 = vector.multi_reduction <add>, %20, %cst_17 [1] : vector<8x32xf32> to vector<8xf32>
    %22 = vector.shape_cast %21 : vector<8xf32> to vector<8x1xf32>
    %cst_18 = arith.constant 3.200000e+01 : f32
    %23 = vector.broadcast %cst_18 : f32 to vector<8x1xf32>
    %24 = arith.divf %22, %23 : vector<8x1xf32>
    %cst_19 = arith.constant 9.99999974E-6 : f32
    %25 = vector.broadcast %cst_19 : f32 to vector<8x1xf32>
    %26 = arith.addf %24, %25 : vector<8x1xf32>
    %27 = math.rsqrt %26 : vector<8x1xf32>
    %28 = vector.broadcast %27 : vector<8x1xf32> to vector<8x32xf32>
    %29 = arith.mulf %19, %28 : vector<8x32xf32>
    %30 = vector.broadcast %4 : vector<1x32xf32> to vector<8x32xf32>
    %31 = arith.mulf %29, %30 : vector<8x32xf32>
    %32 = vector.broadcast %5 : vector<1x32xf32> to vector<8x32xf32>
    %33 = arith.addf %31, %32 : vector<8x32xf32>
    %c0_20 = arith.constant 0 : index
    %c0_21 = arith.constant 0 : index
    %34 = vector.load %arg7[%c0_20, %c0_21] : memref<32x96xf32, #tpu.memory_space<vmem>>, vector<32x96xf32>
    %cst_22 = arith.constant dense<0.000000e+00> : vector<8x96xf32>
    %35 = tpu.matmul %33, %34, %cst_22 {dimension_numbers = #tpu.dot_dimension_numbers<[1], [0], [0], [1], [0, 0, 1, 1], [], []>} : vector<8x32xf32>, vector<32x96xf32>, vector<8x96xf32> -> vector<8x96xf32>
    %c0_23 = arith.constant 0 : index
    %c0_24 = arith.constant 0 : index
    %36 = vector.load %arg8[%c0_23, %c0_24] : memref<1x96xf32, #tpu.memory_space<vmem>>, vector<1x96xf32>
    %37 = vector.broadcast %36 : vector<1x96xf32> to vector<8x96xf32>
    %38 = arith.addf %35, %37 : vector<8x96xf32>
    %39 = vector.extract_strided_slice %38 {offsets = [0, 0], sizes = [8, 32], strides = [1, 1]} : vector<8x96xf32> to vector<8x32xf32>
    %40 = vector.extract_strided_slice %38 {offsets = [0, 32], sizes = [8, 32], strides = [1, 1]} : vector<8x96xf32> to vector<8x32xf32>
    %41 = vector.extract_strided_slice %38 {offsets = [0, 64], sizes = [8, 32], strides = [1, 1]} : vector<8x96xf32> to vector<8x32xf32>
    %42 = vector.extract_strided_slice %39 {offsets = [0, 0], sizes = [8, 8], strides = [1, 1]} : vector<8x32xf32> to vector<8x8xf32>
    %43 = vector.extract_strided_slice %40 {offsets = [0, 0], sizes = [8, 8], strides = [1, 1]} : vector<8x32xf32> to vector<8x8xf32>
    %44 = vector.extract_strided_slice %41 {offsets = [0, 0], sizes = [8, 8], strides = [1, 1]} : vector<8x32xf32> to vector<8x8xf32>
    %cst_25 = arith.constant dense<0.000000e+00> : vector<8x8xf32>
    %45 = tpu.matmul %42, %43, %cst_25 {dimension_numbers = #tpu.dot_dimension_numbers<[1], [1], [0], [0], [0, 0, 1, 0], [], []>} : vector<8x8xf32>, vector<8x8xf32>, vector<8x8xf32> -> vector<8x8xf32>
    %cst_26 = arith.constant 9.99999971E-10 : f32
    %46 = vector.broadcast %cst_26 : f32 to vector<8x8xf32>
    %47 = arith.select %9, %45, %46 : vector<8x8xi1>, vector<8x8xf32>
    %cst_27 = arith.constant dense<0xFF800000> : vector<8xf32>
    %48 = vector.multi_reduction <maximumf>, %47, %cst_27 [1] : vector<8x8xf32> to vector<8xf32>
    %49 = vector.shape_cast %48 : vector<8xf32> to vector<8x1xf32>
    %50 = vector.broadcast %49 : vector<8x1xf32> to vector<8x8xf32>
    %51 = arith.subf %47, %50 : vector<8x8xf32>
    %52 = math.exp %51 : vector<8x8xf32>
    %cst_28 = arith.constant dense<0.000000e+00> : vector<8xf32>
    %53 = vector.multi_reduction <add>, %52, %cst_28 [1] : vector<8x8xf32> to vector<8xf32>
    %54 = vector.shape_cast %53 : vector<8xf32> to vector<8x1xf32>
    %55 = vector.broadcast %54 : vector<8x1xf32> to vector<8x8xf32>
    %56 = arith.divf %52, %55 : vector<8x8xf32>
    %cst_29 = arith.constant dense<0.000000e+00> : vector<8x8xf32>
    %57 = tpu.matmul %56, %44, %cst_29 {dimension_numbers = #tpu.dot_dimension_numbers<[1], [0], [0], [1], [0, 0, 1, 1], [], []>} : vector<8x8xf32>, vector<8x8xf32>, vector<8x8xf32> -> vector<8x8xf32>
    %c0_30 = arith.constant 0 : index
    %c0_31 = arith.constant 0 : index
    %58 = vector.load %arg18[%c0_30, %c0_31] : memref<8x32xf32, #tpu.memory_space<vmem>>, vector<8x8xf32>
    tpu.vector_store %arg18[%c0_30, %c0_31], %57 {strides = array<i32>} : memref<8x32xf32, #tpu.memory_space<vmem>>, vector<8x8xf32>,
    %59 = vector.extract_strided_slice %39 {offsets = [0, 8], sizes = [8, 8], strides = [1, 1]} : vector<8x32xf32> to vector<8x8xf32>
    %60 = vector.extract_strided_slice %40 {offsets = [0, 8], sizes = [8, 8], strides = [1, 1]} : vector<8x32xf32> to vector<8x8xf32>
    %61 = vector.extract_strided_slice %41 {offsets = [0, 8], sizes = [8, 8], strides = [1, 1]} : vector<8x32xf32> to vector<8x8xf32>
    %cst_32 = arith.constant dense<0.000000e+00> : vector<8x8xf32>
    %62 = tpu.matmul %59, %60, %cst_32 {dimension_numbers = #tpu.dot_dimension_numbers<[1], [1], [0], [0], [0, 0, 1, 0], [], []>} : vector<8x8xf32>, vector<8x8xf32>, vector<8x8xf32> -> vector<8x8xf32>
    %cst_33 = arith.constant 9.99999971E-10 : f32
    %63 = vector.broadcast %cst_33 : f32 to vector<8x8xf32>
    %64 = arith.select %9, %62, %63 : vector<8x8xi1>, vector<8x8xf32>
    %cst_34 = arith.constant dense<0xFF800000> : vector<8xf32>
    %65 = vector.multi_reduction <maximumf>, %64, %cst_34 [1] : vector<8x8xf32> to vector<8xf32>
    %66 = vector.shape_cast %65 : vector<8xf32> to vector<8x1xf32>
    %67 = vector.broadcast %66 : vector<8x1xf32> to vector<8x8xf32>
    %68 = arith.subf %64, %67 : vector<8x8xf32>
    %69 = math.exp %68 : vector<8x8xf32>
    %cst_35 = arith.constant dense<0.000000e+00> : vector<8xf32>
    %70 = vector.multi_reduction <add>, %69, %cst_35 [1] : vector<8x8xf32> to vector<8xf32>
    %71 = vector.shape_cast %70 : vector<8xf32> to vector<8x1xf32>
    %72 = vector.broadcast %71 : vector<8x1xf32> to vector<8x8xf32>
    %73 = arith.divf %69, %72 : vector<8x8xf32>
    %cst_36 = arith.constant dense<0.000000e+00> : vector<8x8xf32>
    %74 = tpu.matmul %73, %61, %cst_36 {dimension_numbers = #tpu.dot_dimension_numbers<[1], [0], [0], [1], [0, 0, 1, 1], [], []>} : vector<8x8xf32>, vector<8x8xf32>, vector<8x8xf32> -> vector<8x8xf32>
    %c0_37 = arith.constant 0 : index
    %c8 = arith.constant 8 : index
    %75 = vector.load %arg18[%c0_37, %c8] : memref<8x32xf32, #tpu.memory_space<vmem>>, vector<8x8xf32>
    tpu.vector_store %arg18[%c0_37, %c8], %74 {strides = array<i32>} : memref<8x32xf32, #tpu.memory_space<vmem>>, vector<8x8xf32>,
    %76 = vector.extract_strided_slice %39 {offsets = [0, 16], sizes = [8, 8], strides = [1, 1]} : vector<8x32xf32> to vector<8x8xf32>
    %77 = vector.extract_strided_slice %40 {offsets = [0, 16], sizes = [8, 8], strides = [1, 1]} : vector<8x32xf32> to vector<8x8xf32>
    %78 = vector.extract_strided_slice %41 {offsets = [0, 16], sizes = [8, 8], strides = [1, 1]} : vector<8x32xf32> to vector<8x8xf32>
    %cst_38 = arith.constant dense<0.000000e+00> : vector<8x8xf32>
    %79 = tpu.matmul %76, %77, %cst_38 {dimension_numbers = #tpu.dot_dimension_numbers<[1], [1], [0], [0], [0, 0, 1, 0], [], []>} : vector<8x8xf32>, vector<8x8xf32>, vector<8x8xf32> -> vector<8x8xf32>
    %cst_39 = arith.constant 9.99999971E-10 : f32
    %80 = vector.broadcast %cst_39 : f32 to vector<8x8xf32>
    %81 = arith.select %9, %79, %80 : vector<8x8xi1>, vector<8x8xf32>
    %cst_40 = arith.constant dense<0xFF800000> : vector<8xf32>
    %82 = vector.multi_reduction <maximumf>, %81, %cst_40 [1] : vector<8x8xf32> to vector<8xf32>
    %83 = vector.shape_cast %82 : vector<8xf32> to vector<8x1xf32>
    %84 = vector.broadcast %83 : vector<8x1xf32> to vector<8x8xf32>
    %85 = arith.subf %81, %84 : vector<8x8xf32>
    %86 = math.exp %85 : vector<8x8xf32>
    %cst_41 = arith.constant dense<0.000000e+00> : vector<8xf32>
    %87 = vector.multi_reduction <add>, %86, %cst_41 [1] : vector<8x8xf32> to vector<8xf32>
    %88 = vector.shape_cast %87 : vector<8xf32> to vector<8x1xf32>
    %89 = vector.broadcast %88 : vector<8x1xf32> to vector<8x8xf32>
    %90 = arith.divf %86, %89 : vector<8x8xf32>
    %cst_42 = arith.constant dense<0.000000e+00> : vector<8x8xf32>
    %91 = tpu.matmul %90, %78, %cst_42 {dimension_numbers = #tpu.dot_dimension_numbers<[1], [0], [0], [1], [0, 0, 1, 1], [], []>} : vector<8x8xf32>, vector<8x8xf32>, vector<8x8xf32> -> vector<8x8xf32>
    %c0_43 = arith.constant 0 : index
    %c16 = arith.constant 16 : index
    %92 = vector.load %arg18[%c0_43, %c16] : memref<8x32xf32, #tpu.memory_space<vmem>>, vector<8x8xf32>
    tpu.vector_store %arg18[%c0_43, %c16], %91 {strides = array<i32>} : memref<8x32xf32, #tpu.memory_space<vmem>>, vector<8x8xf32>,
    %93 = vector.extract_strided_slice %39 {offsets = [0, 24], sizes = [8, 8], strides = [1, 1]} : vector<8x32xf32> to vector<8x8xf32>
    %94 = vector.extract_strided_slice %40 {offsets = [0, 24], sizes = [8, 8], strides = [1, 1]} : vector<8x32xf32> to vector<8x8xf32>
    %95 = vector.extract_strided_slice %41 {offsets = [0, 24], sizes = [8, 8], strides = [1, 1]} : vector<8x32xf32> to vector<8x8xf32>
    %cst_44 = arith.constant dense<0.000000e+00> : vector<8x8xf32>
    %96 = tpu.matmul %93, %94, %cst_44 {dimension_numbers = #tpu.dot_dimension_numbers<[1], [1], [0], [0], [0, 0, 1, 0], [], []>} : vector<8x8xf32>, vector<8x8xf32>, vector<8x8xf32> -> vector<8x8xf32>
    %cst_45 = arith.constant 9.99999971E-10 : f32
    %97 = vector.broadcast %cst_45 : f32 to vector<8x8xf32>
    %98 = arith.select %9, %96, %97 : vector<8x8xi1>, vector<8x8xf32>
    %cst_46 = arith.constant dense<0xFF800000> : vector<8xf32>
    %99 = vector.multi_reduction <maximumf>, %98, %cst_46 [1] : vector<8x8xf32> to vector<8xf32>
    %100 = vector.shape_cast %99 : vector<8xf32> to vector<8x1xf32>
    %101 = vector.broadcast %100 : vector<8x1xf32> to vector<8x8xf32>
    %102 = arith.subf %98, %101 : vector<8x8xf32>
    %103 = math.exp %102 : vector<8x8xf32>
    %cst_47 = arith.constant dense<0.000000e+00> : vector<8xf32>
    %104 = vector.multi_reduction <add>, %103, %cst_47 [1] : vector<8x8xf32> to vector<8xf32>
    %105 = vector.shape_cast %104 : vector<8xf32> to vector<8x1xf32>
    %106 = vector.broadcast %105 : vector<8x1xf32> to vector<8x8xf32>
    %107 = arith.divf %103, %106 : vector<8x8xf32>
    %cst_48 = arith.constant dense<0.000000e+00> : vector<8x8xf32>
    %108 = tpu.matmul %107, %95, %cst_48 {dimension_numbers = #tpu.dot_dimension_numbers<[1], [0], [0], [1], [0, 0, 1, 1], [], []>} : vector<8x8xf32>, vector<8x8xf32>, vector<8x8xf32> -> vector<8x8xf32>
    %c0_49 = arith.constant 0 : index
    %c24 = arith.constant 24 : index
    %109 = vector.load %arg18[%c0_49, %c24] : memref<8x32xf32, #tpu.memory_space<vmem>>, vector<8x8xf32>
    tpu.vector_store %arg18[%c0_49, %c24], %108 {strides = array<i32>} : memref<8x32xf32, #tpu.memory_space<vmem>>, vector<8x8xf32>,
    %c0_50 = arith.constant 0 : index
    %c0_51 = arith.constant 0 : index
    %110 = vector.load %arg18[%c0_50, %c0_51] : memref<8x32xf32, #tpu.memory_space<vmem>>, vector<8x32xf32>
    %111 = arith.addf %110, %1 : vector<8x32xf32>
    %cst_52 = arith.constant dense<0.000000e+00> : vector<8xf32>
    %112 = vector.multi_reduction <add>, %111, %cst_52 [1] : vector<8x32xf32> to vector<8xf32>
    %113 = vector.shape_cast %112 : vector<8xf32> to vector<8x1xf32>
    %cst_53 = arith.constant 3.200000e+01 : f32
    %114 = vector.broadcast %cst_53 : f32 to vector<8x1xf32>
    %115 = arith.divf %113, %114 : vector<8x1xf32>
    %116 = vector.broadcast %115 : vector<8x1xf32> to vector<8x32xf32>
    %117 = arith.subf %111, %116 : vector<8x32xf32>
    %118 = arith.mulf %117, %117 : vector<8x32xf32>
    %cst_54 = arith.constant dense<0.000000e+00> : vector<8xf32>
    %119 = vector.multi_reduction <add>, %118, %cst_54 [1] : vector<8x32xf32> to vector<8xf32>
    %120 = vector.shape_cast %119 : vector<8xf32> to vector<8x1xf32>
    %cst_55 = arith.constant 3.200000e+01 : f32
    %121 = vector.broadcast %cst_55 : f32 to vector<8x1xf32>
    %122 = arith.divf %120, %121 : vector<8x1xf32>
    %cst_56 = arith.constant 9.99999974E-6 : f32
    %123 = vector.broadcast %cst_56 : f32 to vector<8x1xf32>
    %124 = arith.addf %122, %123 : vector<8x1xf32>
    %125 = math.rsqrt %124 : vector<8x1xf32>
    %126 = vector.broadcast %125 : vector<8x1xf32> to vector<8x32xf32>
    %127 = arith.mulf %117, %126 : vector<8x32xf32>
    %128 = vector.broadcast %4 : vector<1x32xf32> to vector<8x32xf32>
    %129 = arith.mulf %127, %128 : vector<8x32xf32>
    %130 = vector.broadcast %5 : vector<1x32xf32> to vector<8x32xf32>
    %131 = arith.addf %129, %130 : vector<8x32xf32>
    %cst_57 = arith.constant dense<0.000000e+00> : vector<8xf32>
    %132 = vector.multi_reduction <add>, %131, %cst_57 [1] : vector<8x32xf32> to vector<8xf32>
    %133 = vector.shape_cast %132 : vector<8xf32> to vector<8x1xf32>
    %cst_58 = arith.constant 3.200000e+01 : f32
    %134 = vector.broadcast %cst_58 : f32 to vector<8x1xf32>
    %135 = arith.divf %133, %134 : vector<8x1xf32>
    %136 = vector.broadcast %135 : vector<8x1xf32> to vector<8x32xf32>
    %137 = arith.subf %131, %136 : vector<8x32xf32>
    %138 = arith.mulf %137, %137 : vector<8x32xf32>
    %cst_59 = arith.constant dense<0.000000e+00> : vector<8xf32>
    %139 = vector.multi_reduction <add>, %138, %cst_59 [1] : vector<8x32xf32> to vector<8xf32>
    %140 = vector.shape_cast %139 : vector<8xf32> to vector<8x1xf32>
    %cst_60 = arith.constant 3.200000e+01 : f32
    %141 = vector.broadcast %cst_60 : f32 to vector<8x1xf32>
    %142 = arith.divf %140, %141 : vector<8x1xf32>
    %cst_61 = arith.constant 9.99999974E-6 : f32
    %143 = vector.broadcast %cst_61 : f32 to vector<8x1xf32>
    %144 = arith.addf %142, %143 : vector<8x1xf32>
    %145 = math.rsqrt %144 : vector<8x1xf32>
    %146 = vector.broadcast %145 : vector<8x1xf32> to vector<8x32xf32>
    %147 = arith.mulf %137, %146 : vector<8x32xf32>
    %148 = vector.broadcast %4 : vector<1x32xf32> to vector<8x32xf32>
    %149 = arith.mulf %147, %148 : vector<8x32xf32>
    %150 = vector.broadcast %5 : vector<1x32xf32> to vector<8x32xf32>
    %151 = arith.addf %149, %150 : vector<8x32xf32>
    %c0_62 = arith.constant 0 : index
    %c0_63 = arith.constant 0 : index
    %152 = vector.load %arg9[%c0_62, %c0_63] : memref<32x32xf32, #tpu.memory_space<vmem>>, vector<32x32xf32>
    %cst_64 = arith.constant dense<0.000000e+00> : vector<8x32xf32>
    %153 = tpu.matmul %151, %152, %cst_64 {dimension_numbers = #tpu.dot_dimension_numbers<[1], [0], [0], [1], [0, 0, 1, 1], [], []>} : vector<8x32xf32>, vector<32x32xf32>, vector<8x32xf32> -> vector<8x32xf32>
    %c0_65 = arith.constant 0 : index
    %c0_66 = arith.constant 0 : index
    %154 = vector.load %arg10[%c0_65, %c0_66] : memref<1x32xf32, #tpu.memory_space<vmem>>, vector<1x32xf32>
    %155 = vector.broadcast %154 : vector<1x32xf32> to vector<8x32xf32>
    %156 = arith.addf %153, %155 : vector<8x32xf32>
    %c0_67 = arith.constant 0 : index
    %c0_68 = arith.constant 0 : index
    %157 = vector.load %arg11[%c0_67, %c0_68] : memref<32x64xf32, #tpu.memory_space<vmem>>, vector<32x64xf32>
    %cst_69 = arith.constant dense<0.000000e+00> : vector<16x64xf32>
    %158 = tpu.matmul %3, %157, %cst_69 {dimension_numbers = #tpu.dot_dimension_numbers<[1], [0], [0], [1], [0, 0, 1, 1], [], []>} : vector<16x32xf32>, vector<32x64xf32>, vector<16x64xf32> -> vector<16x64xf32>
    %c0_70 = arith.constant 0 : index
    %c0_71 = arith.constant 0 : index
    %159 = vector.load %arg12[%c0_70, %c0_71] : memref<1x64xf32, #tpu.memory_space<vmem>>, vector<1x64xf32>
    %160 = vector.broadcast %159 : vector<1x64xf32> to vector<16x64xf32>
    %161 = arith.addf %158, %160 : vector<16x64xf32>
    %162 = vector.extract_strided_slice %161 {offsets = [0, 0], sizes = [16, 32], strides = [1, 1]} : vector<16x64xf32> to vector<16x32xf32>
    %163 = vector.extract_strided_slice %161 {offsets = [0, 32], sizes = [16, 32], strides = [1, 1]} : vector<16x64xf32> to vector<16x32xf32>
    %164 = vector.extract_strided_slice %156 {offsets = [0, 0], sizes = [8, 8], strides = [1, 1]} : vector<8x32xf32> to vector<8x8xf32>
    %165 = vector.extract_strided_slice %162 {offsets = [0, 0], sizes = [16, 8], strides = [1, 1]} : vector<16x32xf32> to vector<16x8xf32>
    %166 = vector.extract_strided_slice %163 {offsets = [0, 0], sizes = [16, 8], strides = [1, 1]} : vector<16x32xf32> to vector<16x8xf32>
    %cst_72 = arith.constant dense<0.000000e+00> : vector<8x16xf32>
    %167 = tpu.matmul %164, %165, %cst_72 {dimension_numbers = #tpu.dot_dimension_numbers<[1], [1], [0], [0], [0, 0, 1, 0], [], []>} : vector<8x8xf32>, vector<16x8xf32>, vector<8x16xf32> -> vector<8x16xf32>
    %cst_73 = arith.constant 9.99999971E-10 : f32
    %168 = vector.broadcast %cst_73 : f32 to vector<8x16xf32>
    %169 = arith.select %13, %167, %168 : vector<8x16xi1>, vector<8x16xf32>
    %cst_74 = arith.constant dense<0xFF800000> : vector<8xf32>
    %170 = vector.multi_reduction <maximumf>, %169, %cst_74 [1] : vector<8x16xf32> to vector<8xf32>
    %171 = vector.shape_cast %170 : vector<8xf32> to vector<8x1xf32>
    %172 = vector.broadcast %171 : vector<8x1xf32> to vector<8x16xf32>
    %173 = arith.subf %169, %172 : vector<8x16xf32>
    %174 = math.exp %173 : vector<8x16xf32>
    %cst_75 = arith.constant dense<0.000000e+00> : vector<8xf32>
    %175 = vector.multi_reduction <add>, %174, %cst_75 [1] : vector<8x16xf32> to vector<8xf32>
    %176 = vector.shape_cast %175 : vector<8xf32> to vector<8x1xf32>
    %177 = vector.broadcast %176 : vector<8x1xf32> to vector<8x16xf32>
    %178 = arith.divf %174, %177 : vector<8x16xf32>
    %cst_76 = arith.constant dense<0.000000e+00> : vector<8x8xf32>
    %179 = tpu.matmul %178, %166, %cst_76 {dimension_numbers = #tpu.dot_dimension_numbers<[1], [0], [0], [1], [0, 0, 1, 1], [], []>} : vector<8x16xf32>, vector<16x8xf32>, vector<8x8xf32> -> vector<8x8xf32>
    %c0_77 = arith.constant 0 : index
    %c0_78 = arith.constant 0 : index
    %180 = vector.load %arg18[%c0_77, %c0_78] : memref<8x32xf32, #tpu.memory_space<vmem>>, vector<8x8xf32>
    tpu.vector_store %arg18[%c0_77, %c0_78], %179 {strides = array<i32>} : memref<8x32xf32, #tpu.memory_space<vmem>>, vector<8x8xf32>,
    %181 = vector.extract_strided_slice %156 {offsets = [0, 8], sizes = [8, 8], strides = [1, 1]} : vector<8x32xf32> to vector<8x8xf32>
    %182 = vector.extract_strided_slice %162 {offsets = [0, 8], sizes = [16, 8], strides = [1, 1]} : vector<16x32xf32> to vector<16x8xf32>
    %183 = vector.extract_strided_slice %163 {offsets = [0, 8], sizes = [16, 8], strides = [1, 1]} : vector<16x32xf32> to vector<16x8xf32>
    %cst_79 = arith.constant dense<0.000000e+00> : vector<8x16xf32>
    %184 = tpu.matmul %181, %182, %cst_79 {dimension_numbers = #tpu.dot_dimension_numbers<[1], [1], [0], [0], [0, 0, 1, 0], [], []>} : vector<8x8xf32>, vector<16x8xf32>, vector<8x16xf32> -> vector<8x16xf32>
    %cst_80 = arith.constant 9.99999971E-10 : f32
    %185 = vector.broadcast %cst_80 : f32 to vector<8x16xf32>
    %186 = arith.select %13, %184, %185 : vector<8x16xi1>, vector<8x16xf32>
    %cst_81 = arith.constant dense<0xFF800000> : vector<8xf32>
    %187 = vector.multi_reduction <maximumf>, %186, %cst_81 [1] : vector<8x16xf32> to vector<8xf32>
    %188 = vector.shape_cast %187 : vector<8xf32> to vector<8x1xf32>
    %189 = vector.broadcast %188 : vector<8x1xf32> to vector<8x16xf32>
    %190 = arith.subf %186, %189 : vector<8x16xf32>
    %191 = math.exp %190 : vector<8x16xf32>
    %cst_82 = arith.constant dense<0.000000e+00> : vector<8xf32>
    %192 = vector.multi_reduction <add>, %191, %cst_82 [1] : vector<8x16xf32> to vector<8xf32>
    %193 = vector.shape_cast %192 : vector<8xf32> to vector<8x1xf32>
    %194 = vector.broadcast %193 : vector<8x1xf32> to vector<8x16xf32>
    %195 = arith.divf %191, %194 : vector<8x16xf32>
    %cst_83 = arith.constant dense<0.000000e+00> : vector<8x8xf32>
    %196 = tpu.matmul %195, %183, %cst_83 {dimension_numbers = #tpu.dot_dimension_numbers<[1], [0], [0], [1], [0, 0, 1, 1], [], []>} : vector<8x16xf32>, vector<16x8xf32>, vector<8x8xf32> -> vector<8x8xf32>
    %c0_84 = arith.constant 0 : index
    %c8_85 = arith.constant 8 : index
    %197 = vector.load %arg18[%c0_84, %c8_85] : memref<8x32xf32, #tpu.memory_space<vmem>>, vector<8x8xf32>
    tpu.vector_store %arg18[%c0_84, %c8_85], %196 {strides = array<i32>} : memref<8x32xf32, #tpu.memory_space<vmem>>, vector<8x8xf32>,
    %198 = vector.extract_strided_slice %156 {offsets = [0, 16], sizes = [8, 8], strides = [1, 1]} : vector<8x32xf32> to vector<8x8xf32>
    %199 = vector.extract_strided_slice %162 {offsets = [0, 16], sizes = [16, 8], strides = [1, 1]} : vector<16x32xf32> to vector<16x8xf32>
    %200 = vector.extract_strided_slice %163 {offsets = [0, 16], sizes = [16, 8], strides = [1, 1]} : vector<16x32xf32> to vector<16x8xf32>
    %cst_86 = arith.constant dense<0.000000e+00> : vector<8x16xf32>
    %201 = tpu.matmul %198, %199, %cst_86 {dimension_numbers = #tpu.dot_dimension_numbers<[1], [1], [0], [0], [0, 0, 1, 0], [], []>} : vector<8x8xf32>, vector<16x8xf32>, vector<8x16xf32> -> vector<8x16xf32>
    %cst_87 = arith.constant 9.99999971E-10 : f32
    %202 = vector.broadcast %cst_87 : f32 to vector<8x16xf32>
    %203 = arith.select %13, %201, %202 : vector<8x16xi1>, vector<8x16xf32>
    %cst_88 = arith.constant dense<0xFF800000> : vector<8xf32>
    %204 = vector.multi_reduction <maximumf>, %203, %cst_88 [1] : vector<8x16xf32> to vector<8xf32>
    %205 = vector.shape_cast %204 : vector<8xf32> to vector<8x1xf32>
    %206 = vector.broadcast %205 : vector<8x1xf32> to vector<8x16xf32>
    %207 = arith.subf %203, %206 : vector<8x16xf32>
    %208 = math.exp %207 : vector<8x16xf32>
    %cst_89 = arith.constant dense<0.000000e+00> : vector<8xf32>
    %209 = vector.multi_reduction <add>, %208, %cst_89 [1] : vector<8x16xf32> to vector<8xf32>
    %210 = vector.shape_cast %209 : vector<8xf32> to vector<8x1xf32>
    %211 = vector.broadcast %210 : vector<8x1xf32> to vector<8x16xf32>
    %212 = arith.divf %208, %211 : vector<8x16xf32>
    %cst_90 = arith.constant dense<0.000000e+00> : vector<8x8xf32>
    %213 = tpu.matmul %212, %200, %cst_90 {dimension_numbers = #tpu.dot_dimension_numbers<[1], [0], [0], [1], [0, 0, 1, 1], [], []>} : vector<8x16xf32>, vector<16x8xf32>, vector<8x8xf32> -> vector<8x8xf32>
    %c0_91 = arith.constant 0 : index
    %c16_92 = arith.constant 16 : index
    %214 = vector.load %arg18[%c0_91, %c16_92] : memref<8x32xf32, #tpu.memory_space<vmem>>, vector<8x8xf32>
    tpu.vector_store %arg18[%c0_91, %c16_92], %213 {strides = array<i32>} : memref<8x32xf32, #tpu.memory_space<vmem>>, vector<8x8xf32>,
    %215 = vector.extract_strided_slice %156 {offsets = [0, 24], sizes = [8, 8], strides = [1, 1]} : vector<8x32xf32> to vector<8x8xf32>
    %216 = vector.extract_strided_slice %162 {offsets = [0, 24], sizes = [16, 8], strides = [1, 1]} : vector<16x32xf32> to vector<16x8xf32>
    %217 = vector.extract_strided_slice %163 {offsets = [0, 24], sizes = [16, 8], strides = [1, 1]} : vector<16x32xf32> to vector<16x8xf32>
    %cst_93 = arith.constant dense<0.000000e+00> : vector<8x16xf32>
    %218 = tpu.matmul %215, %216, %cst_93 {dimension_numbers = #tpu.dot_dimension_numbers<[1], [1], [0], [0], [0, 0, 1, 0], [], []>} : vector<8x8xf32>, vector<16x8xf32>, vector<8x16xf32> -> vector<8x16xf32>
    %cst_94 = arith.constant 9.99999971E-10 : f32
    %219 = vector.broadcast %cst_94 : f32 to vector<8x16xf32>
    %220 = arith.select %13, %218, %219 : vector<8x16xi1>, vector<8x16xf32>
    %cst_95 = arith.constant dense<0xFF800000> : vector<8xf32>
    %221 = vector.multi_reduction <maximumf>, %220, %cst_95 [1] : vector<8x16xf32> to vector<8xf32>
    %222 = vector.shape_cast %221 : vector<8xf32> to vector<8x1xf32>
    %223 = vector.broadcast %222 : vector<8x1xf32> to vector<8x16xf32>
    %224 = arith.subf %220, %223 : vector<8x16xf32>
    %225 = math.exp %224 : vector<8x16xf32>
    %cst_96 = arith.constant dense<0.000000e+00> : vector<8xf32>
    %226 = vector.multi_reduction <add>, %225, %cst_96 [1] : vector<8x16xf32> to vector<8xf32>
    %227 = vector.shape_cast %226 : vector<8xf32> to vector<8x1xf32>
    %228 = vector.broadcast %227 : vector<8x1xf32> to vector<8x16xf32>
    %229 = arith.divf %225, %228 : vector<8x16xf32>
    %cst_97 = arith.constant dense<0.000000e+00> : vector<8x8xf32>
    %230 = tpu.matmul %229, %217, %cst_97 {dimension_numbers = #tpu.dot_dimension_numbers<[1], [0], [0], [1], [0, 0, 1, 1], [], []>} : vector<8x16xf32>, vector<16x8xf32>, vector<8x8xf32> -> vector<8x8xf32>
    %c0_98 = arith.constant 0 : index
    %c24_99 = arith.constant 24 : index
    %231 = vector.load %arg18[%c0_98, %c24_99] : memref<8x32xf32, #tpu.memory_space<vmem>>, vector<8x8xf32>
    tpu.vector_store %arg18[%c0_98, %c24_99], %230 {strides = array<i32>} : memref<8x32xf32, #tpu.memory_space<vmem>>, vector<8x8xf32>,
    %c0_100 = arith.constant 0 : index
    %c0_101 = arith.constant 0 : index
    %232 = vector.load %arg18[%c0_100, %c0_101] : memref<8x32xf32, #tpu.memory_space<vmem>>, vector<8x32xf32>
    %233 = arith.addf %232, %131 : vector<8x32xf32>
    %cst_102 = arith.constant dense<0.000000e+00> : vector<8xf32>
    %234 = vector.multi_reduction <add>, %233, %cst_102 [1] : vector<8x32xf32> to vector<8xf32>
    %235 = vector.shape_cast %234 : vector<8xf32> to vector<8x1xf32>
    %cst_103 = arith.constant 3.200000e+01 : f32
    %236 = vector.broadcast %cst_103 : f32 to vector<8x1xf32>
    %237 = arith.divf %235, %236 : vector<8x1xf32>
    %238 = vector.broadcast %237 : vector<8x1xf32> to vector<8x32xf32>
    %239 = arith.subf %233, %238 : vector<8x32xf32>
    %240 = arith.mulf %239, %239 : vector<8x32xf32>
    %cst_104 = arith.constant dense<0.000000e+00> : vector<8xf32>
    %241 = vector.multi_reduction <add>, %240, %cst_104 [1] : vector<8x32xf32> to vector<8xf32>
    %242 = vector.shape_cast %241 : vector<8xf32> to vector<8x1xf32>
    %cst_105 = arith.constant 3.200000e+01 : f32
    %243 = vector.broadcast %cst_105 : f32 to vector<8x1xf32>
    %244 = arith.divf %242, %243 : vector<8x1xf32>
    %cst_106 = arith.constant 9.99999974E-6 : f32
    %245 = vector.broadcast %cst_106 : f32 to vector<8x1xf32>
    %246 = arith.addf %244, %245 : vector<8x1xf32>
    %247 = math.rsqrt %246 : vector<8x1xf32>
    %248 = vector.broadcast %247 : vector<8x1xf32> to vector<8x32xf32>
    %249 = arith.mulf %239, %248 : vector<8x32xf32>
    %250 = vector.broadcast %4 : vector<1x32xf32> to vector<8x32xf32>
    %251 = arith.mulf %249, %250 : vector<8x32xf32>
    %252 = vector.broadcast %5 : vector<1x32xf32> to vector<8x32xf32>
    %253 = arith.addf %251, %252 : vector<8x32xf32>
    %c0_107 = arith.constant 0 : index
    %c0_108 = arith.constant 0 : index
    %254 = vector.load %arg13[%c0_107, %c0_108] : memref<32x64xf32, #tpu.memory_space<vmem>>, vector<32x64xf32>
    %cst_109 = arith.constant dense<0.000000e+00> : vector<8x64xf32>
    %255 = tpu.matmul %253, %254, %cst_109 {dimension_numbers = #tpu.dot_dimension_numbers<[1], [0], [0], [1], [0, 0, 1, 1], [], []>} : vector<8x32xf32>, vector<32x64xf32>, vector<8x64xf32> -> vector<8x64xf32>
    %c0_110 = arith.constant 0 : index
    %c0_111 = arith.constant 0 : index
    %256 = vector.load %arg14[%c0_110, %c0_111] : memref<1x64xf32, #tpu.memory_space<vmem>>, vector<1x64xf32>
    %257 = vector.broadcast %256 : vector<1x64xf32> to vector<8x64xf32>
    %258 = arith.addf %255, %257 : vector<8x64xf32>
    %cst_112 = arith.constant 5.000000e-01 : f32
    %259 = vector.broadcast %cst_112 : f32 to vector<8x64xf32>
    %260 = arith.mulf %259, %258 : vector<8x64xf32>
    %cst_113 = arith.constant 0.707106769 : f32
    %261 = vector.broadcast %cst_113 : f32 to vector<8x64xf32>
    %262 = arith.mulf %258, %261 : vector<8x64xf32>
    %263 = math.absf %262 : vector<8x64xf32>
    %cst_114 = arith.constant 0.327591091 : f32
    %264 = vector.broadcast %cst_114 : f32 to vector<8x64xf32>
    %265 = arith.mulf %264, %263 : vector<8x64xf32>
    %cst_115 = arith.constant 1.000000e+00 : f32
    %266 = vector.broadcast %cst_115 : f32 to vector<8x64xf32>
    %267 = arith.addf %266, %265 : vector<8x64xf32>
    %cst_116 = arith.constant 1.000000e+00 : f32
    %268 = vector.broadcast %cst_116 : f32 to vector<8x64xf32>
    %269 = arith.divf %268, %267 : vector<8x64xf32>
    %cst_117 = arith.constant 1.06140542 : f32
    %270 = vector.broadcast %cst_117 : f32 to vector<8x64xf32>
    %271 = arith.mulf %270, %269 : vector<8x64xf32>
    %cst_118 = arith.constant -1.45315206 : f32
    %272 = vector.broadcast %cst_118 : f32 to vector<8x64xf32>
    %273 = arith.addf %271, %272 : vector<8x64xf32>
    %274 = arith.mulf %273, %269 : vector<8x64xf32>
    %cst_119 = arith.constant 1.42141378 : f32
    %275 = vector.broadcast %cst_119 : f32 to vector<8x64xf32>
    %276 = arith.addf %274, %275 : vector<8x64xf32>
    %277 = arith.mulf %276, %269 : vector<8x64xf32>
    %cst_120 = arith.constant -0.284496725 : f32
    %278 = vector.broadcast %cst_120 : f32 to vector<8x64xf32>
    %279 = arith.addf %277, %278 : vector<8x64xf32>
    %280 = arith.mulf %279, %269 : vector<8x64xf32>
    %cst_121 = arith.constant 0.254829586 : f32
    %281 = vector.broadcast %cst_121 : f32 to vector<8x64xf32>
    %282 = arith.addf %280, %281 : vector<8x64xf32>
    %283 = arith.mulf %282, %269 : vector<8x64xf32>
    %cst_122 = arith.constant 0.000000e+00 : f32
    %284 = vector.broadcast %cst_122 : f32 to vector<8x64xf32>
    %285 = arith.subf %284, %263 : vector<8x64xf32>
    %286 = arith.mulf %285, %263 : vector<8x64xf32>
    %287 = math.exp %286 : vector<8x64xf32>
    %288 = arith.mulf %283, %287 : vector<8x64xf32>
    %cst_123 = arith.constant 1.000000e+00 : f32
    %289 = vector.broadcast %cst_123 : f32 to vector<8x64xf32>
    %290 = arith.subf %289, %288 : vector<8x64xf32>
    %cst_124 = arith.constant 0.000000e+00 : f32
    %291 = vector.broadcast %cst_124 : f32 to vector<8x64xf32>
    %292 = arith.cmpf oge, %262, %291 : vector<8x64xf32>
    %cst_125 = arith.constant 0.000000e+00 : f32
    %293 = vector.broadcast %cst_125 : f32 to vector<8x64xf32>
    %294 = arith.subf %293, %290 : vector<8x64xf32>
    %295 = arith.select %292, %290, %294 : vector<8x64xi1>, vector<8x64xf32>
    %cst_126 = arith.constant 1.000000e+00 : f32
    %296 = vector.broadcast %cst_126 : f32 to vector<8x64xf32>
    %297 = arith.addf %296, %295 : vector<8x64xf32>
    %298 = arith.mulf %260, %297 : vector<8x64xf32>
    %c0_127 = arith.constant 0 : index
    %c0_128 = arith.constant 0 : index
    %299 = vector.load %arg15[%c0_127, %c0_128] : memref<64x32xf32, #tpu.memory_space<vmem>>, vector<64x32xf32>
    %cst_129 = arith.constant dense<0.000000e+00> : vector<8x32xf32>
    %300 = tpu.matmul %298, %299, %cst_129 {dimension_numbers = #tpu.dot_dimension_numbers<[1], [0], [0], [1], [0, 0, 1, 1], [], []>} : vector<8x64xf32>, vector<64x32xf32>, vector<8x32xf32> -> vector<8x32xf32>
    %301 = arith.addf %253, %300 : vector<8x32xf32>
    %c0_130 = arith.constant 0 : index
    %c0_131 = arith.constant 0 : index
    %302 = vector.load %arg16[%c0_130, %c0_131] : memref<1x32xf32, #tpu.memory_space<vmem>>, vector<1x32xf32>
    %303 = vector.broadcast %302 : vector<1x32xf32> to vector<8x32xf32>
    %304 = arith.addf %301, %303 : vector<8x32xf32>
    %c0_132 = arith.constant 0 : index
    %c0_133 = arith.constant 0 : index
    %c0_134 = arith.constant 0 : index
    %305 = vector.load %arg17[%c0_132, %c0_133, %c0_134] : memref<1x8x32xf32, #tpu.memory_space<vmem>>, vector<1x8x32xf32>
    %306 = vector.shape_cast %305 : vector<1x8x32xf32> to vector<8x32xf32>
    %307 = vector.shape_cast %304 : vector<8x32xf32> to vector<1x8x32xf32>
    tpu.vector_store %arg17[%c0_132, %c0_133, %c0_134], %307 {strides = array<i32>} : memref<1x8x32xf32, #tpu.memory_space<vmem>>, vector<1x8x32xf32>,
    return
  }
  func.func @transform_0(%arg0: i32) -> (i32, i32, i32) {
    %c0_i32 = arith.constant 0 : i32
    %c0_i32_0 = arith.constant 0 : i32
    %c0_i32_1 = arith.constant 0 : i32
    return %arg0, %c0_i32, %c0_i32_0 : i32, i32, i32
  }
  func.func @transform_1(%arg0: i32) -> (i32, i32, i32) {
    %c0_i32 = arith.constant 0 : i32
    %c0_i32_0 = arith.constant 0 : i32
    %c0_i32_1 = arith.constant 0 : i32
    return %arg0, %c0_i32, %c0_i32_0 : i32, i32, i32
  }
  func.func @transform_2(%arg0: i32) -> (i32, i32, i32) {
    %c0_i32 = arith.constant 0 : i32
    %c0_i32_0 = arith.constant 0 : i32
    %c0_i32_1 = arith.constant 0 : i32
    return %arg0, %c0_i32, %c0_i32_0 : i32, i32, i32
  }
  func.func @transform_3(%arg0: i32) -> (i32, i32, i32) {
    %c0_i32 = arith.constant 0 : i32
    %c0_i32_0 = arith.constant 0 : i32
    %c0_i32_1 = arith.constant 0 : i32
    return %arg0, %c0_i32, %c0_i32_0 : i32, i32, i32
  }
  func.func @transform_4(%arg0: i32) -> (i32, i32) {
    %c0_i32 = arith.constant 0 : i32
    %c0_i32_0 = arith.constant 0 : i32
    %c0_i32_1 = arith.constant 0 : i32
    return %c0_i32, %c0_i32_0 : i32, i32
  }
  func.func @transform_5(%arg0: i32) -> (i32, i32) {
    %c0_i32 = arith.constant 0 : i32
    %c0_i32_0 = arith.constant 0 : i32
    %c0_i32_1 = arith.constant 0 : i32
    return %c0_i32, %c0_i32_0 : i32, i32
  }
  func.func @transform_6(%arg0: i32) -> (i32, i32) {
    %c0_i32 = arith.constant 0 : i32
    %c0_i32_0 = arith.constant 0 : i32
    %c0_i32_1 = arith.constant 0 : i32
    return %c0_i32, %c0_i32_0 : i32, i32
  }
  func.func @transform_7(%arg0: i32) -> (i32, i32) {
    %c0_i32 = arith.constant 0 : i32
    %c0_i32_0 = arith.constant 0 : i32
    %c0_i32_1 = arith.constant 0 : i32
    return %c0_i32, %c0_i32_0 : i32, i32
  }
  func.func @transform_8(%arg0: i32) -> (i32, i32) {
    %c0_i32 = arith.constant 0 : i32
    %c0_i32_0 = arith.constant 0 : i32
    %c0_i32_1 = arith.constant 0 : i32
    return %c0_i32, %c0_i32_0 : i32, i32
  }
  func.func @transform_9(%arg0: i32) -> (i32, i32) {
    %c0_i32 = arith.constant 0 : i32
    %c0_i32_0 = arith.constant 0 : i32
    %c0_i32_1 = arith.constant 0 : i32
    return %c0_i32, %c0_i32_0 : i32, i32
  }
  func.func @transform_10(%arg0: i32) -> (i32, i32) {
    %c0_i32 = arith.constant 0 : i32
    %c0_i32_0 = arith.constant 0 : i32
    %c0_i32_1 = arith.constant 0 : i32
    return %c0_i32, %c0_i32_0 : i32, i32
  }
  func.func @transform_11(%arg0: i32) -> (i32, i32) {
    %c0_i32 = arith.constant 0 : i32
    %c0_i32_0 = arith.constant 0 : i32
    %c0_i32_1 = arith.constant 0 : i32
    return %c0_i32, %c0_i32_0 : i32, i32
  }
  func.func @transform_12(%arg0: i32) -> (i32, i32) {
    %c0_i32 = arith.constant 0 : i32
    %c0_i32_0 = arith.constant 0 : i32
    %c0_i32_1 = arith.constant 0 : i32
    return %c0_i32, %c0_i32_0 : i32, i32
  }
  func.func @transform_13(%arg0: i32) -> (i32, i32) {
    %c0_i32 = arith.constant 0 : i32
    %c0_i32_0 = arith.constant 0 : i32
    %c0_i32_1 = arith.constant 0 : i32
    return %c0_i32, %c0_i32_0 : i32, i32
  }
  func.func @transform_14(%arg0: i32) -> (i32, i32) {
    %c0_i32 = arith.constant 0 : i32
    %c0_i32_0 = arith.constant 0 : i32
    %c0_i32_1 = arith.constant 0 : i32
    return %c0_i32, %c0_i32_0 : i32, i32
  }
  func.func @transform_15(%arg0: i32) -> (i32, i32) {
    %c0_i32 = arith.constant 0 : i32
    %c0_i32_0 = arith.constant 0 : i32
    %c0_i32_1 = arith.constant 0 : i32
    return %c0_i32, %c0_i32_0 : i32, i32
  }
  func.func @transform_16(%arg0: i32) -> (i32, i32, i32) {
    %c0_i32 = arith.constant 0 : i32
    %c0_i32_0 = arith.constant 0 : i32
    %c0_i32_1 = arith.constant 0 : i32
    return %arg0, %c0_i32, %c0_i32_0 : i32, i32, i32
  }
}

</mosaic_0001>

<llo_original>
// kernel: tpu_custom_call.1
$region0: #{tpu_custom_call.1}
  #allocation0 [shape = 'u32[]', space=smem, size = 0x4, offset = 0x4, fixed_abs, tag = 'smem constant byte address 0x4 - core index']
  #allocation1 [shape = 'u32[72,128]{1,0:T(1,128)}', space=vmem, size = 0x9000, scoped, tag = 'internal scratch']
  #allocation2 [shape = 'f32[8,32]{1,0:T(8,128)}', space=vmem, size = 0x1000, scoped, tag = 'scratch operand']
  %s0 = inlined_call_operand.hbm [shape: f32[2,8,32], index: 0, kind: input, shape index: {}]
  %s1 = inlined_call_operand.vmem [shape: f32[2,16,32], index: 1, kind: input, shape index: {}]
  %s2 = inlined_call_operand.hbm [shape: s8[2,8,8], index: 2, kind: input, shape index: {}]
  %s3 = inlined_call_operand.hbm [shape: s8[2,8,16], index: 3, kind: input, shape index: {}]
  %s4 = inlined_call_operand.vmem [shape: f32[1,32], index: 4, kind: input, shape index: {}]
  %s5 = inlined_call_operand.vmem [shape: f32[1,32], index: 5, kind: input, shape index: {}]
  %s6 = inlined_call_operand.vmem [shape: f32[32,96], index: 6, kind: input, shape index: {}]
  %s7 = inlined_call_operand.vmem [shape: f32[1,96], index: 7, kind: input, shape index: {}]
  %s8 = inlined_call_operand.vmem [shape: f32[32,32], index: 8, kind: input, shape index: {}]
  %s9 = inlined_call_operand.vmem [shape: f32[1,32], index: 9, kind: input, shape index: {}]
  %s10 = inlined_call_operand.hbm [shape: f32[32,64], index: 10, kind: input, shape index: {}]
  %s11 = inlined_call_operand.vmem [shape: f32[1,64], index: 11, kind: input, shape index: {}]
  %s12 = inlined_call_operand.hbm [shape: f32[32,64], index: 12, kind: input, shape index: {}]
  %s13 = inlined_call_operand.vmem [shape: f32[1,64], index: 13, kind: input, shape index: {}]
  %s14 = inlined_call_operand.vmem [shape: f32[64,32], index: 14, kind: input, shape index: {}]
  %s15 = inlined_call_operand.vmem [shape: f32[1,32], index: 15, kind: input, shape index: {}]
  %s16 = inlined_call_operand.hbm [shape: f32[2,8,32], index: 16, kind: output, shape index: {}]
  %s17 = sld [smem:[#allocation0]]
  $region117: #{tpu_custom_call.1} parent=0
    _
  %s19 = ssub.s32 1, %s17
  %s20 = scalar_select 0, %s19, %s17
  $region1: #{tpu_custom_call.1} parent=0
    #allocation3 [shape = 'u8[8192]{0}', space=vmem, size = 0x2000, scoped, tag = 'input window, operand 0']
    #allocation4 [shape = 's32[2]{0}', space=sflag, size = 0x8, scoped, tag = 'scoped memory for tpu_custom_call.1']
    #allocation5 [shape = 's32[2]{0}', space=sflag, size = 0x8, scoped, tag = 'scoped memory for tpu_custom_call.1']
    #allocation6 [shape = 'u8[2048]{0}', space=vmem, size = 0x800, scoped, tag = 'input window, operand 2']
    #allocation7 [shape = 's32[2]{0}', space=sflag, size = 0x8, scoped, tag = 'scoped memory for tpu_custom_call.1']
    #allocation8 [shape = 'u8[2048]{0}', space=vmem, size = 0x800, scoped, tag = 'input window, operand 3']
    #allocation9 [shape = 'u8[16384]{0}', space=vmem, size = 0x4000, scoped, tag = 'input window, operand 10, single buffered']
    #allocation10 [shape = 's32[1]{0}', space=sflag, size = 0x4, scoped, tag = 'scoped memory for tpu_custom_call.1']
    #allocation11 [shape = 'u8[16384]{0}', space=vmem, size = 0x4000, scoped, tag = 'input window, operand 12, single buffered']
    #allocation12 [shape = 'u8[8192]{0}', space=vmem, size = 0x2000, scoped, tag = 'output window, operand 0']
    %21 = vsyncpa [#allocation4], 0
    %s22 = scalar_lea.sflag [#allocation4], 1
    %23 = vsyncpa %s22, 0
    %24 = vsyncpa [#allocation7], 0
    %s25 = scalar_lea.sflag [#allocation7], 1
    %26 = vsyncpa %s25, 0
    %27 = vsyncpa [#allocation10], 0
    %28 = vsyncpa [#allocation5], 0
    %s29 = scalar_lea.sflag [#allocation5], 1
    %30 = vsyncpa %s29, 0
    loop: start=0, step=1, limit=4
    $region2: #{tpu_custom_call.1} parent=1 // loop_pre_header
      _
    $region3: #{tpu_custom_call.1} parent=1 // loop_header
      %s32 = sphi 0, %s36
      %p33 = scmp.ge.s32.totalorder %s32, 4
      %s42 = sphi 0, %s44
      %s45 = sphi 0, %s42
      %s46 = sphi 0, %s45
      %s62 = sphi 0, %s46
      %s68 = sphi 0, %s70
      %s71 = sphi 0, %s68
      %s72 = sphi 0, %s71
      %s88 = sphi 0, %s72
      %s94 = sphi 0, %s96
      %s97 = sphi 0, %s94
      %s98 = sphi 0, %s97
      %s114 = sphi 0, %s98
      %s120 = sphi 0, %s122
      %s123 = sphi 0, %s120
      %s124 = sphi 0, %s123
      %s140 = sphi 0, %s124
      %s144 = sphi 0, %s144
      %s146 = sphi 0, %s144
      %s147 = sphi 0, %s146
      %s161 = sphi 0, %s147
      %s165 = sphi 0, %s165
      %s167 = sphi 0, %s165
      %s168 = sphi 0, %s167
      %s182 = sphi 0, %s168
      %s186 = sphi 0, %s186
      %s188 = sphi 0, %s186
      %s189 = sphi 0, %s188
      %s203 = sphi 0, %s189
      %s207 = sphi 0, %s207
      %s209 = sphi 0, %s207
      %s210 = sphi 0, %s209
      %s224 = sphi 0, %s210
      %s228 = sphi 0, %s228
      %s230 = sphi 0, %s228
      %s231 = sphi 0, %s230
      %s245 = sphi 0, %s231
      %s249 = sphi 0, %s249
      %s251 = sphi 0, %s249
      %s252 = sphi 0, %s251
      %s266 = sphi 0, %s252
      %s270 = sphi 0, %s270
      %s272 = sphi 0, %s270
      %s273 = sphi 0, %s272
      %s287 = sphi 0, %s273
      %s291 = sphi 0, %s291
      %s293 = sphi 0, %s291
      %s294 = sphi 0, %s293
      %s308 = sphi 0, %s294
      %s312 = sphi 0, %s312
      %s314 = sphi 0, %s312
      %s315 = sphi 0, %s314
      %s329 = sphi 0, %s315
      %s333 = sphi 0, %s333
      %s335 = sphi 0, %s333
      %s336 = sphi 0, %s335
      %s350 = sphi 0, %s336
      %s354 = sphi 0, %s354
      %s356 = sphi 0, %s354
      %s357 = sphi 0, %s356
      %s371 = sphi 0, %s357
      %s375 = sphi 0, %s375
      %s377 = sphi 0, %s375
      %s378 = sphi 0, %s377
      %s392 = sphi 0, %s378
      %s398 = sphi 0, %s400
      %s401 = sphi 0, %s398
      %s402 = sphi 0, %s401
      %s418 = sphi 0, %s402
    $region4: #{tpu_custom_call.1} parent=1 // loop_header_branch
      %35 = sbr.rel (%p33) target = $region8
    $region5: #{tpu_custom_call.1} parent=1 // loop_body
      %s37 = ssub.s32 %s32, 1
      %s38 = ssub.s32 %s32, 2
      %s39 = sadd.s32 %s32, 1
      %s40 = ssub.s32 %s32, %s39
      %p41 = scmp.eq.s32.totalorder %s40, 0
      %s43 = sadd.s32 %s42, 1
      %s44 = scalar_select %p41, %s42, %s43
      %p47 = pneg %p41
      %p48 = scmp.eq.s32.totalorder %s32, 1
      %p49 = por %p47, %p48
      %p50 = scmp.ne.s32.totalorder %s42, %s45
      %p51 = scmp.eq.s32.totalorder %s32, 0
      %p52 = por %p50, %p51
      %p53 = scmp.ne.s32.totalorder %s42, %s45
      %p54 = scmp.eq.s32.totalorder %s37, 1
      %p55 = por %p53, %p54
      %p56 = scmp.ne.s32.totalorder %s45, %s46
      %p57 = scmp.eq.s32.totalorder %s37, 0
      %p58 = por %p56, %p57
      %p59 = scmp.ne.s32.totalorder %s45, %s46
      %p60 = scmp.eq.s32.totalorder %s38, 1
      %p61 = por %p59, %p60
      %p63 = scmp.ne.s32.totalorder %s46, %s62
      %p64 = scmp.eq.s32.totalorder %s38, 0
      %p65 = por %p63, %p64
      %s66 = ssub.s32 %s32, %s39
      %p67 = scmp.eq.s32.totalorder %s66, 0
      %s69 = sadd.s32 %s68, 1
      %s70 = scalar_select %p67, %s68, %s69
      %p73 = pneg %p67
      %p74 = scmp.eq.s32.totalorder %s32, 1
      %p75 = por %p73, %p74
      %p76 = scmp.ne.s32.totalorder %s68, %s71
      %p77 = scmp.eq.s32.totalorder %s32, 0
      %p78 = por %p76, %p77
      %p79 = scmp.ne.s32.totalorder %s68, %s71
      %p80 = scmp.eq.s32.totalorder %s37, 1
      %p81 = por %p79, %p80
      %p82 = scmp.ne.s32.totalorder %s71, %s72
      %p83 = scmp.eq.s32.totalorder %s37, 0
      %p84 = por %p82, %p83
      %p85 = scmp.ne.s32.totalorder %s71, %s72
      %p86 = scmp.eq.s32.totalorder %s38, 1
      %p87 = por %p85, %p86
      %p89 = scmp.ne.s32.totalorder %s72, %s88
      %p90 = scmp.eq.s32.totalorder %s38, 0
      %p91 = por %p89, %p90
      %s92 = ssub.s32 %s32, %s39
      %p93 = scmp.eq.s32.totalorder %s92, 0
      %s95 = sadd.s32 %s94, 1
      %s96 = scalar_select %p93, %s94, %s95
      %p99 = pneg %p93
      %p100 = scmp.eq.s32.totalorder %s32, 1
      %p101 = por %p99, %p100
      %p102 = scmp.ne.s32.totalorder %s94, %s97
      %p103 = scmp.eq.s32.totalorder %s32, 0
      %p104 = por %p102, %p103
      %p105 = scmp.ne.s32.totalorder %s94, %s97
      %p106 = scmp.eq.s32.totalorder %s37, 1
      %p107 = por %p105, %p106
      %p108 = scmp.ne.s32.totalorder %s97, %s98
      %p109 = scmp.eq.s32.totalorder %s37, 0
      %p110 = por %p108, %p109
      %p111 = scmp.ne.s32.totalorder %s97, %s98
      %p112 = scmp.eq.s32.totalorder %s38, 1
      %p113 = por %p111, %p112
      %p115 = scmp.ne.s32.totalorder %s98, %s114
      %p116 = scmp.eq.s32.totalorder %s38, 0
      %p117 = por %p115, %p116
      %s118 = ssub.s32 %s32, %s39
      %p119 = scmp.eq.s32.totalorder %s118, 0
      %s121 = sadd.s32 %s120, 1
      %s122 = scalar_select %p119, %s120, %s121
      %p125 = pneg %p119
      %p126 = scmp.eq.s32.totalorder %s32, 1
      %p127 = por %p125, %p126
      %p128 = scmp.ne.s32.totalorder %s120, %s123
      %p129 = scmp.eq.s32.totalorder %s32, 0
      %p130 = por %p128, %p129
      %p131 = scmp.ne.s32.totalorder %s120, %s123
      %p132 = scmp.eq.s32.totalorder %s37, 1
      %p133 = por %p131, %p132
      %p134 = scmp.ne.s32.totalorder %s123, %s124
      %p135 = scmp.eq.s32.totalorder %s37, 0
      %p136 = por %p134, %p135
      %p137 = scmp.ne.s32.totalorder %s123, %s124
      %p138 = scmp.eq.s32.totalorder %s38, 1
      %p139 = por %p137, %p138
      %p141 = scmp.ne.s32.totalorder %s124, %s140
      %p142 = scmp.eq.s32.totalorder %s38, 0
      %p143 = por %p141, %p142
      %s145 = sadd.s32 %s144, 1
      %p148 = scmp.eq.s32.totalorder %s32, 1
      %p149 = scmp.ne.s32.totalorder %s144, %s146
      %p150 = scmp.eq.s32.totalorder %s32, 0
      %p151 = por %p149, %p150
      %p152 = scmp.ne.s32.totalorder %s144, %s146
      %p153 = scmp.eq.s32.totalorder %s37, 1
      %p154 = por %p152, %p153
      %p155 = scmp.ne.s32.totalorder %s146, %s147
      %p156 = scmp.eq.s32.totalorder %s37, 0
      %p157 = por %p155, %p156
      %p158 = scmp.ne.s32.totalorder %s146, %s147
      %p159 = scmp.eq.s32.totalorder %s38, 1
      %p160 = por %p158, %p159
      %p162 = scmp.ne.s32.totalorder %s147, %s161
      %p163 = scmp.eq.s32.totalorder %s38, 0
      %p164 = por %p162, %p163
      %s166 = sadd.s32 %s165, 1
      %p169 = scmp.eq.s32.totalorder %s32, 1
      %p170 = scmp.ne.s32.totalorder %s165, %s167
      %p171 = scmp.eq.s32.totalorder %s32, 0
      %p172 = por %p170, %p171
      %p173 = scmp.ne.s32.totalorder %s165, %s167
      %p174 = scmp.eq.s32.totalorder %s37, 1
      %p175 = por %p173, %p174
      %p176 = scmp.ne.s32.totalorder %s167, %s168
      %p177 = scmp.eq.s32.totalorder %s37, 0
      %p178 = por %p176, %p177
      %p179 = scmp.ne.s32.totalorder %s167, %s168
      %p180 = scmp.eq.s32.totalorder %s38, 1
      %p181 = por %p179, %p180
      %p183 = scmp.ne.s32.totalorder %s168, %s182
      %p184 = scmp.eq.s32.totalorder %s38, 0
      %p185 = por %p183, %p184
      %s187 = sadd.s32 %s186, 1
      %p190 = scmp.eq.s32.totalorder %s32, 1
      %p191 = scmp.ne.s32.totalorder %s186, %s188
      %p192 = scmp.eq.s32.totalorder %s32, 0
      %p193 = por %p191, %p192
      %p194 = scmp.ne.s32.totalorder %s186, %s188
      %p195 = scmp.eq.s32.totalorder %s37, 1
      %p196 = por %p194, %p195
      %p197 = scmp.ne.s32.totalorder %s188, %s189
      %p198 = scmp.eq.s32.totalorder %s37, 0
      %p199 = por %p197, %p198
      %p200 = scmp.ne.s32.totalorder %s188, %s189
      %p201 = scmp.eq.s32.totalorder %s38, 1
      %p202 = por %p200, %p201
      %p204 = scmp.ne.s32.totalorder %s189, %s203
      %p205 = scmp.eq.s32.totalorder %s38, 0
      %p206 = por %p204, %p205
      %s208 = sadd.s32 %s207, 1
      %p211 = scmp.eq.s32.totalorder %s32, 1
      %p212 = scmp.ne.s32.totalorder %s207, %s209
      %p213 = scmp.eq.s32.totalorder %s32, 0
      %p214 = por %p212, %p213
      %p215 = scmp.ne.s32.totalorder %s207, %s209
      %p216 = scmp.eq.s32.totalorder %s37, 1
      %p217 = por %p215, %p216
      %p218 = scmp.ne.s32.totalorder %s209, %s210
      %p219 = scmp.eq.s32.totalorder %s37, 0
      %p220 = por %p218, %p219
      %p221 = scmp.ne.s32.totalorder %s209, %s210
      %p222 = scmp.eq.s32.totalorder %s38, 1
      %p223 = por %p221, %p222
      %p225 = scmp.ne.s32.totalorder %s210, %s224
      %p226 = scmp.eq.s32.totalorder %s38, 0
      %p227 = por %p225, %p226
      %s229 = sadd.s32 %s228, 1
      %p232 = scmp.eq.s32.totalorder %s32, 1
      %p233 = scmp.ne.s32.totalorder %s228, %s230
      %p234 = scmp.eq.s32.totalorder %s32, 0
      %p235 = por %p233, %p234
      %p236 = scmp.ne.s32.totalorder %s228, %s230
      %p237 = scmp.eq.s32.totalorder %s37, 1
      %p238 = por %p236, %p237
      %p239 = scmp.ne.s32.totalorder %s230, %s231
      %p240 = scmp.eq.s32.totalorder %s37, 0
      %p241 = por %p239, %p240
      %p242 = scmp.ne.s32.totalorder %s230, %s231
      %p243 = scmp.eq.s32.totalorder %s38, 1
      %p244 = por %p242, %p243
      %p246 = scmp.ne.s32.totalorder %s231, %s245
      %p247 = scmp.eq.s32.totalorder %s38, 0
      %p248 = por %p246, %p247
      %s250 = sadd.s32 %s249, 1
      %p253 = scmp.eq.s32.totalorder %s32, 1
      %p254 = scmp.ne.s32.totalorder %s249, %s251
      %p255 = scmp.eq.s32.totalorder %s32, 0
      %p256 = por %p254, %p255
      %p257 = scmp.ne.s32.totalorder %s249, %s251
      %p258 = scmp.eq.s32.totalorder %s37, 1
      %p259 = por %p257, %p258
      %p260 = scmp.ne.s32.totalorder %s251, %s252
      %p261 = scmp.eq.s32.totalorder %s37, 0
      %p262 = por %p260, %p261
      %p263 = scmp.ne.s32.totalorder %s251, %s252
      %p264 = scmp.eq.s32.totalorder %s38, 1
      %p265 = por %p263, %p264
      %p267 = scmp.ne.s32.totalorder %s252, %s266
      %p268 = scmp.eq.s32.totalorder %s38, 0
      %p269 = por %p267, %p268
      %s271 = sadd.s32 %s270, 1
      %p274 = scmp.eq.s32.totalorder %s32, 1
      %p275 = scmp.ne.s32.totalorder %s270, %s272
      %p276 = scmp.eq.s32.totalorder %s32, 0
      %p277 = por %p275, %p276
      %p278 = scmp.ne.s32.totalorder %s270, %s272
      %p279 = scmp.eq.s32.totalorder %s37, 1
      %p280 = por %p278, %p279
      %p281 = scmp.ne.s32.totalorder %s272, %s273
      %p282 = scmp.eq.s32.totalorder %s37, 0
      %p283 = por %p281, %p282
      %p284 = scmp.ne.s32.totalorder %s272, %s273
      %p285 = scmp.eq.s32.totalorder %s38, 1
      %p286 = por %p284, %p285
      %p288 = scmp.ne.s32.totalorder %s273, %s287
      %p289 = scmp.eq.s32.totalorder %s38, 0
      %p290 = por %p288, %p289
      %s292 = sadd.s32 %s291, 1
      %p295 = scmp.eq.s32.totalorder %s32, 1
      %p296 = scmp.ne.s32.totalorder %s291, %s293
      %p297 = scmp.eq.s32.totalorder %s32, 0
      %p298 = por %p296, %p297
      %p299 = scmp.ne.s32.totalorder %s291, %s293
      %p300 = scmp.eq.s32.totalorder %s37, 1
      %p301 = por %p299, %p300
      %p302 = scmp.ne.s32.totalorder %s293, %s294
      %p303 = scmp.eq.s32.totalorder %s37, 0
      %p304 = por %p302, %p303
      %p305 = scmp.ne.s32.totalorder %s293, %s294
      %p306 = scmp.eq.s32.totalorder %s38, 1
      %p307 = por %p305, %p306
      %p309 = scmp.ne.s32.totalorder %s294, %s308
      %p310 = scmp.eq.s32.totalorder %s38, 0
      %p311 = por %p309, %p310
      %s313 = sadd.s32 %s312, 1
      %p316 = scmp.eq.s32.totalorder %s32, 1
      %p317 = scmp.ne.s32.totalorder %s312, %s314
      %p318 = scmp.eq.s32.totalorder %s32, 0
      %p319 = por %p317, %p318
      %p320 = scmp.ne.s32.totalorder %s312, %s314
      %p321 = scmp.eq.s32.totalorder %s37, 1
      %p322 = por %p320, %p321
      %p323 = scmp.ne.s32.totalorder %s314, %s315
      %p324 = scmp.eq.s32.totalorder %s37, 0
      %p325 = por %p323, %p324
      %p326 = scmp.ne.s32.totalorder %s314, %s315
      %p327 = scmp.eq.s32.totalorder %s38, 1
      %p328 = por %p326, %p327
      %p330 = scmp.ne.s32.totalorder %s315, %s329
      %p331 = scmp.eq.s32.totalorder %s38, 0
      %p332 = por %p330, %p331
      %s334 = sadd.s32 %s333, 1
      %p337 = scmp.eq.s32.totalorder %s32, 1
      %p338 = scmp.ne.s32.totalorder %s333, %s335
      %p339 = scmp.eq.s32.totalorder %s32, 0
      %p340 = por %p338, %p339
      %p341 = scmp.ne.s32.totalorder %s333, %s335
      %p342 = scmp.eq.s32.totalorder %s37, 1
      %p343 = por %p341, %p342
      %p344 = scmp.ne.s32.totalorder %s335, %s336
      %p345 = scmp.eq.s32.totalorder %s37, 0
      %p346 = por %p344, %p345
      %p347 = scmp.ne.s32.totalorder %s335, %s336
      %p348 = scmp.eq.s32.totalorder %s38, 1
      %p349 = por %p347, %p348
      %p351 = scmp.ne.s32.totalorder %s336, %s350
      %p352 = scmp.eq.s32.totalorder %s38, 0
      %p353 = por %p351, %p352
      %s355 = sadd.s32 %s354, 1
      %p358 = scmp.eq.s32.totalorder %s32, 1
      %p359 = scmp.ne.s32.totalorder %s354, %s356
      %p360 = scmp.eq.s32.totalorder %s32, 0
      %p361 = por %p359, %p360
      %p362 = scmp.ne.s32.totalorder %s354, %s356
      %p363 = scmp.eq.s32.totalorder %s37, 1
      %p364 = por %p362, %p363
      %p365 = scmp.ne.s32.totalorder %s356, %s357
      %p366 = scmp.eq.s32.totalorder %s37, 0
      %p367 = por %p365, %p366
      %p368 = scmp.ne.s32.totalorder %s356, %s357
      %p369 = scmp.eq.s32.totalorder %s38, 1
      %p370 = por %p368, %p369
      %p372 = scmp.ne.s32.totalorder %s357, %s371
      %p373 = scmp.eq.s32.totalorder %s38, 0
      %p374 = por %p372, %p373
      %s376 = sadd.s32 %s375, 1
      %p379 = scmp.eq.s32.totalorder %s32, 1
      %p380 = scmp.ne.s32.totalorder %s375, %s377
      %p381 = scmp.eq.s32.totalorder %s32, 0
      %p382 = por %p380, %p381
      %p383 = scmp.ne.s32.totalorder %s375, %s377
      %p384 = scmp.eq.s32.totalorder %s37, 1
      %p385 = por %p383, %p384
      %p386 = scmp.ne.s32.totalorder %s377, %s378
      %p387 = scmp.eq.s32.totalorder %s37, 0
      %p388 = por %p386, %p387
      %p389 = scmp.ne.s32.totalorder %s377, %s378
      %p390 = scmp.eq.s32.totalorder %s38, 1
      %p391 = por %p389, %p390
      %p393 = scmp.ne.s32.totalorder %s378, %s392
      %p394 = scmp.eq.s32.totalorder %s38, 0
      %p395 = por %p393, %p394
      %s396 = ssub.s32 %s32, %s39
      %p397 = scmp.eq.s32.totalorder %s396, 0
      %s399 = sadd.s32 %s398, 1
      %s400 = scalar_select %p397, %s398, %s399
      %p403 = pneg %p397
      %p404 = scmp.eq.s32.totalorder %s32, 1
      %p405 = por %p403, %p404
      %p406 = scmp.ne.s32.totalorder %s398, %s401
      %p407 = scmp.eq.s32.totalorder %s32, 0
      %p408 = por %p406, %p407
      %p409 = scmp.ne.s32.totalorder %s398, %s401
      %p410 = scmp.eq.s32.totalorder %s37, 1
      %p411 = por %p409, %p410
      %p412 = scmp.ne.s32.totalorder %s401, %s402
      %p413 = scmp.eq.s32.totalorder %s37, 0
      %p414 = por %p412, %p413
      %p415 = scmp.ne.s32.totalorder %s401, %s402
      %p416 = scmp.eq.s32.totalorder %s38, 1
      %p417 = por %p415, %p416
      %p419 = scmp.ne.s32.totalorder %s402, %s418
      %p420 = scmp.eq.s32.totalorder %s38, 0
      %p421 = por %p419, %p420
      %p422 = scmp.le.s32.totalorder 1, %s32
      %p423 = scmp.lt.s32.totalorder %s32, 3
      %p424 = pnand %p422, %p423
      %p425 = pneg %p424
      // Predicated region
      $region9: #{tpu_custom_call.1} parent=5 // pred_check
        _
      $region10: #{tpu_custom_call.1} parent=5 // pred_check_branch
        %427 = sbr.rel (%p424) target = $region12
      $region11: #{tpu_custom_call.1} parent=5 // pred_region
        %s428 = ssub.s32 %s32, 1
        // Predicated region
        $region13: #{tpu_custom_call.1} parent=11 // pred_check
          %p429 = pneg %p157
        $region14: #{tpu_custom_call.1} parent=11 // pred_check_branch
          %431 = sbr.rel (%p429) target = $region16
        $region15: #{tpu_custom_call.1} parent=11 // pred_region
          _
        $region16: #{tpu_custom_call.1} parent=11 // pred_fallthru
          _
        // Predicated region
        $region17: #{tpu_custom_call.1} parent=11 // pred_check
          %p432 = pneg %p178
        $region18: #{tpu_custom_call.1} parent=11 // pred_check_branch
          %434 = sbr.rel (%p432) target = $region20
        $region19: #{tpu_custom_call.1} parent=11 // pred_region
          _
        $region20: #{tpu_custom_call.1} parent=11 // pred_fallthru
          _
        // Predicated region
        $region21: #{tpu_custom_call.1} parent=11 // pred_check
          %p435 = pneg %p199
        $region22: #{tpu_custom_call.1} parent=11 // pred_check_branch
          %437 = sbr.rel (%p435) target = $region24
        $region23: #{tpu_custom_call.1} parent=11 // pred_region
          _
        $region24: #{tpu_custom_call.1} parent=11 // pred_fallthru
          _
        // Predicated region
        $region25: #{tpu_custom_call.1} parent=11 // pred_check
          %p438 = pneg %p220
        $region26: #{tpu_custom_call.1} parent=11 // pred_check_branch
          %440 = sbr.rel (%p438) target = $region28
        $region27: #{tpu_custom_call.1} parent=11 // pred_region
          _
        $region28: #{tpu_custom_call.1} parent=11 // pred_fallthru
          _
        // Predicated region
        $region29: #{tpu_custom_call.1} parent=11 // pred_check
          %p441 = pneg %p241
        $region30: #{tpu_custom_call.1} parent=11 // pred_check_branch
          %443 = sbr.rel (%p441) target = $region32
        $region31: #{tpu_custom_call.1} parent=11 // pred_region
          _
        $region32: #{tpu_custom_call.1} parent=11 // pred_fallthru
          _
        // Predicated region
        $region33: #{tpu_custom_call.1} parent=11 // pred_check
          %p444 = pneg %p262
        $region34: #{tpu_custom_call.1} parent=11 // pred_check_branch
          %446 = sbr.rel (%p444) target = $region36
        $region35: #{tpu_custom_call.1} parent=11 // pred_region
          _
        $region36: #{tpu_custom_call.1} parent=11 // pred_fallthru
          _
        // Predicated region
        $region37: #{tpu_custom_call.1} parent=11 // pred_check
          %p447 = pneg %p283
        $region38: #{tpu_custom_call.1} parent=11 // pred_check_branch
          %449 = sbr.rel (%p447) target = $region40
        $region39: #{tpu_custom_call.1} parent=11 // pred_region
          %451 = vsyncadd [#allocation10], 0
          %s452 = sshll.u32 %s10, 4
          %s453 = int_to_ptr.hbm [resolvable:$true] %s452
          %s454 = sshll.u32 [#allocation9], 4
          %s455 = int_to_ptr.vmem [resolvable:$true] %s454
          %460 = dma.hbm_to_vmem [thread:$0]  %s453, 512, %s455, [#allocation10], 128, 128, 8
        $region40: #{tpu_custom_call.1} parent=11 // pred_fallthru
          _
        // Predicated region
        $region41: #{tpu_custom_call.1} parent=11 // pred_check
          %p461 = pneg %p304
        $region42: #{tpu_custom_call.1} parent=11 // pred_check_branch
          %463 = sbr.rel (%p461) target = $region44
        $region43: #{tpu_custom_call.1} parent=11 // pred_region
          _
        $region44: #{tpu_custom_call.1} parent=11 // pred_fallthru
          _
        // Predicated region
        $region45: #{tpu_custom_call.1} parent=11 // pred_check
          %p464 = pneg %p325
        $region46: #{tpu_custom_call.1} parent=11 // pred_check_branch
          %466 = sbr.rel (%p464) target = $region48
        $region47: #{tpu_custom_call.1} parent=11 // pred_region
          %468 = vsyncadd [#allocation10], 0
          %s469 = sshll.u32 %s12, 4
          %s470 = int_to_ptr.hbm [resolvable:$true] %s469
          %s471 = sshll.u32 [#allocation11], 4
          %s472 = int_to_ptr.vmem [resolvable:$true] %s471
          %477 = dma.hbm_to_vmem [thread:$0]  %s470, 512, %s472, [#allocation10], 128, 128, 8
        $region48: #{tpu_custom_call.1} parent=11 // pred_fallthru
          _
        // Predicated region
        $region49: #{tpu_custom_call.1} parent=11 // pred_check
          %p478 = pneg %p346
        $region50: #{tpu_custom_call.1} parent=11 // pred_check_branch
          %480 = sbr.rel (%p478) target = $region52
        $region51: #{tpu_custom_call.1} parent=11 // pred_region
          _
        $region52: #{tpu_custom_call.1} parent=11 // pred_fallthru
          _
        // Predicated region
        $region53: #{tpu_custom_call.1} parent=11 // pred_check
          %p481 = pneg %p367
        $region54: #{tpu_custom_call.1} parent=11 // pred_check_branch
          %483 = sbr.rel (%p481) target = $region56
        $region55: #{tpu_custom_call.1} parent=11 // pred_region
          _
        $region56: #{tpu_custom_call.1} parent=11 // pred_fallthru
          _
        // Predicated region
        $region57: #{tpu_custom_call.1} parent=11 // pred_check
          %p484 = pneg %p388
        $region58: #{tpu_custom_call.1} parent=11 // pred_check_branch
          %486 = sbr.rel (%p484) target = $region60
        $region59: #{tpu_custom_call.1} parent=11 // pred_region
          _
        $region60: #{tpu_custom_call.1} parent=11 // pred_fallthru
          _
      $region12: #{tpu_custom_call.1} parent=5 // pred_fallthru
        _
      %p487 = scmp.lt.s32.totalorder %s32, 2
      // Predicated region
      $region61: #{tpu_custom_call.1} parent=5 // pred_check
        %p488 = pneg %p487
      $region62: #{tpu_custom_call.1} parent=5 // pred_check_branch
        %490 = sbr.rel (%p488) target = $region64
      $region63: #{tpu_custom_call.1} parent=5 // pred_region
        // Predicated region
        $region65: #{tpu_custom_call.1} parent=63 // pred_check
          %p491 = pneg %p52
        $region66: #{tpu_custom_call.1} parent=63 // pred_check_branch
          %493 = sbr.rel (%p491) target = $region68
        $region67: #{tpu_custom_call.1} parent=63 // pred_region
          %s494 = sand.u32 %s42, 1
          %s495 = scalar_lea.sflag [#allocation4], %s494
          %s496 = sand.u32 %s42, 1
          %s497 = smul.addr %s496, 8
          %s498 = scalar_lea.vmem [#allocation3], %s497
          %500 = vsyncadd %s495, 0
          %s501 = smul.addr %s32, 8
          %s502 = scalar_lea.hbm %s0, %s501
          %s504 = sshll.u32 %s502, 4
          %s505 = int_to_ptr.hbm [resolvable:$true] %s504
          %s506 = sshll.u32 %s498, 4
          %s507 = int_to_ptr.vmem [resolvable:$true] %s506
          %509 = dma.hbm_to_vmem [thread:$0]  %s505, 128, %s507, %s495
        $region68: #{tpu_custom_call.1} parent=63 // pred_fallthru
          _
        // Predicated region
        $region69: #{tpu_custom_call.1} parent=63 // pred_check
          %p510 = pneg %p78
        $region70: #{tpu_custom_call.1} parent=63 // pred_check_branch
          %512 = sbr.rel (%p510) target = $region72
        $region71: #{tpu_custom_call.1} parent=63 // pred_region
          %p513 = scmp.lt.s32.totalorder %s32, 1
          %s514 = scalar_select %p513, %s32, 1
          %s515 = smul.addr %s514, 2
          %s516 = smul.addr %s515, 8
          %s517 = scalar_lea.vmem %s1, %s516
        $region72: #{tpu_custom_call.1} parent=63 // pred_fallthru
          _
        // Predicated region
        $region73: #{tpu_custom_call.1} parent=63 // pred_check
          %p518 = pneg %p104
        $region74: #{tpu_custom_call.1} parent=63 // pred_check_branch
          %520 = sbr.rel (%p518) target = $region76
        $region75: #{tpu_custom_call.1} parent=63 // pred_region
          %s521 = sand.u32 %s32, 1
          %s522 = scalar_lea.sflag [#allocation7], %s521
          %s523 = sand.u32 %s94, 1
          %s524 = smul.addr %s523, 2
          %s525 = scalar_lea.vmem [#allocation6], %s524
          %527 = vsyncadd %s522, 0
          %s528 = smul.addr %s32, 2
          %s529 = scalar_lea.hbm %s2, %s528
          %s531 = sshll.u32 %s529, 4
          %s532 = int_to_ptr.hbm [resolvable:$true] %s531
          %s533 = sshll.u32 %s525, 4
          %s534 = int_to_ptr.vmem [resolvable:$true] %s533
          %536 = dma.hbm_to_vmem [thread:$0]  %s532, 32, %s534, %s522
        $region76: #{tpu_custom_call.1} parent=63 // pred_fallthru
          _
        // Predicated region
        $region77: #{tpu_custom_call.1} parent=63 // pred_check
          %p537 = pneg %p130
        $region78: #{tpu_custom_call.1} parent=63 // pred_check_branch
          %539 = sbr.rel (%p537) target = $region80
        $region79: #{tpu_custom_call.1} parent=63 // pred_region
          %s540 = sand.u32 %s32, 1
          %s541 = scalar_lea.sflag [#allocation7], %s540
          %s542 = sand.u32 %s120, 1
          %s543 = smul.addr %s542, 2
          %s544 = scalar_lea.vmem [#allocation8], %s543
          %546 = vsyncadd %s541, 0
          %s547 = smul.addr %s32, 2
          %s548 = scalar_lea.hbm %s3, %s547
          %s550 = sshll.u32 %s548, 4
          %s551 = int_to_ptr.hbm [resolvable:$true] %s550
          %s552 = sshll.u32 %s544, 4
          %s553 = int_to_ptr.vmem [resolvable:$true] %s552
          %555 = dma.hbm_to_vmem [thread:$0]  %s551, 32, %s553, %s541
        $region80: #{tpu_custom_call.1} parent=63 // pred_fallthru
          _
      $region64: #{tpu_custom_call.1} parent=5 // pred_fallthru
        _
      %p556 = scmp.le.s32.totalorder 1, %s32
      %p557 = scmp.lt.s32.totalorder %s32, 3
      %p558 = pnand %p556, %p557
      %p559 = pneg %p558
      // Predicated region
      $region81: #{tpu_custom_call.1} parent=5 // pred_check
        _
      $region82: #{tpu_custom_call.1} parent=5 // pred_check_branch
        %561 = sbr.rel (%p558) target = $region84
      $region83: #{tpu_custom_call.1} parent=5 // pred_region
        %s562 = ssub.s32 %s32, 1
        %s563 = sand.u32 %s45, 1
        %s564 = scalar_lea.sflag [#allocation4], %s563
        %s565 = sand.u32 %s45, 1
        %s566 = smul.addr %s565, 8
        %s567 = scalar_lea.vmem [#allocation3], %s566
        // Predicated region
        $region85: #{tpu_custom_call.1} parent=83 // pred_check
          %p568 = pneg %p58
        $region86: #{tpu_custom_call.1} parent=83 // pred_check_branch
          %570 = sbr.rel (%p568) target = $region88
        $region87: #{tpu_custom_call.1} parent=83 // pred_region
          %572 = dma.done %s564, 128
        $region88: #{tpu_custom_call.1} parent=83 // pred_fallthru
          _
        %s573 = sand.u32 %s37, 1
        %s574 = scalar_lea.sflag [#allocation7], %s573
        %s575 = sand.u32 %s97, 1
        %s576 = smul.addr %s575, 2
        %s577 = scalar_lea.vmem [#allocation6], %s576
        // Predicated region
        $region89: #{tpu_custom_call.1} parent=83 // pred_check
          %p578 = pneg %p110
        $region90: #{tpu_custom_call.1} parent=83 // pred_check_branch
          %580 = sbr.rel (%p578) target = $region92
        $region91: #{tpu_custom_call.1} parent=83 // pred_region
          %582 = dma.done %s574, 32
        $region92: #{tpu_custom_call.1} parent=83 // pred_fallthru
          _
        %s583 = sand.u32 %s37, 1
        %s584 = scalar_lea.sflag [#allocation7], %s583
        %s585 = sand.u32 %s123, 1
        %s586 = smul.addr %s585, 2
        %s587 = scalar_lea.vmem [#allocation8], %s586
        // Predicated region
        $region93: #{tpu_custom_call.1} parent=83 // pred_check
          %p588 = pneg %p136
        $region94: #{tpu_custom_call.1} parent=83 // pred_check_branch
          %590 = sbr.rel (%p588) target = $region96
        $region95: #{tpu_custom_call.1} parent=83 // pred_region
          %592 = dma.done %s584, 32
        $region96: #{tpu_custom_call.1} parent=83 // pred_fallthru
          _
        // Predicated region
        $region97: #{tpu_custom_call.1} parent=83 // pred_check
          %p593 = pneg %p283
        $region98: #{tpu_custom_call.1} parent=83 // pred_check_branch
          %595 = sbr.rel (%p593) target = $region100
        $region99: #{tpu_custom_call.1} parent=83 // pred_region
          %597 = dma.done [#allocation10], 512
        $region100: #{tpu_custom_call.1} parent=83 // pred_fallthru
          _
        // Predicated region
        $region101: #{tpu_custom_call.1} parent=83 // pred_check
          %p598 = pneg %p325
        $region102: #{tpu_custom_call.1} parent=83 // pred_check_branch
          %600 = sbr.rel (%p598) target = $region104
        $region103: #{tpu_custom_call.1} parent=83 // pred_region
          %602 = dma.done [#allocation10], 512
        $region104: #{tpu_custom_call.1} parent=83 // pred_fallthru
          _
        %s603 = sand.u32 %s45, 1
        %s604 = scalar_lea.sflag [#allocation4], %s603
        %s605 = sand.u32 %s45, 1
        %s606 = smul.addr %s605, 8
        %s607 = scalar_lea.vmem [#allocation3], %s606
        %p608 = pneg %p58
        %p609 = pneg %p55
        %p610 = scmp.lt.s32.totalorder %s37, 1
        %s611 = scalar_select %p610, %s37, 1
        %s612 = smul.addr %s611, 2
        %s613 = smul.addr %s612, 8
        %s614 = scalar_lea.vmem %s1, %s613
        %p615 = pneg %p84
        %p616 = pneg %p81
        %s617 = sand.u32 %s37, 1
        %s618 = scalar_lea.sflag [#allocation7], %s617
        %s619 = sand.u32 %s97, 1
        %s620 = smul.addr %s619, 2
        %s621 = scalar_lea.vmem [#allocation6], %s620
        %p622 = pneg %p110
        %p623 = pneg %p107
        %s624 = sand.u32 %s37, 1
        %s625 = scalar_lea.sflag [#allocation7], %s624
        %s626 = sand.u32 %s123, 1
        %s627 = smul.addr %s626, 2
        %s628 = scalar_lea.vmem [#allocation8], %s627
        %p629 = pneg %p136
        %p630 = pneg %p133
        %p631 = pneg %p157
        %p632 = pneg %p154
        %p633 = pneg %p178
        %p634 = pneg %p175
        %p635 = pneg %p199
        %p636 = pneg %p196
        %p637 = pneg %p220
        %p638 = pneg %p217
        %p639 = pneg %p241
        %p640 = pneg %p238
        %p641 = pneg %p262
        %p642 = pneg %p259
        %p643 = pneg %p283
        %p644 = pneg %p280
        %p645 = pneg %p304
        %p646 = pneg %p301
        %p647 = pneg %p325
        %p648 = pneg %p322
        %p649 = pneg %p346
        %p650 = pneg %p343
        %p651 = pneg %p367
        %p652 = pneg %p364
        %p653 = pneg %p388
        %p654 = pneg %p385
        %p655 = pneg %p414
        %p656 = pneg %p411
        %s657 = sand.u32 %s401, 1
        %s658 = scalar_lea.sflag [#allocation5], %s657
        %s659 = sand.u32 %s401, 1
        %s660 = smul.addr %s659, 8
        %s661 = scalar_lea.vmem [#allocation12], %s660
        %p662 = scmp.lt.s32.totalorder %s37, 1
        %s663 = scalar_select %p662, %s37, 1
        %s664 = smul.addr %s663, 2
        %s665 = smul.addr %s664, 8
        %s666 = scalar_lea.vmem %s1, %s665
        %v669 = vld [vmem:[%s567] sm:$0xff]
        %v670 = vld [vmem:[%s666] sm:$0xff]
        %v671 = vld [vmem:[%s666 + $0x8] sm:$0xff]
        %v672 = vld [vmem:[%s4] sm:$0x1]
        %v673 = vld [vmem:[%s5] sm:$0x1]
        %v674 = vld [vmem:[%s577] sm:$0x3]
        %vm675 = vnez %v674
        %v676 = vld [vmem:[%s587] sm:$0x3]
        %vm677 = vnez %v676
        %vm678 = vcmask 261120
        %v679 = vsel %vm678, %v669, 0.0
        %680 = vadd.xlane.f32.xlu0 %v679
        %v681 = vpop.xlane.xlu0 %680
        %v682 = vrcp.pop 32.0
        %v683 = vmul.f32 32.0, %v682
        %v684 = vsub.f32 1.0, %v683
        %v685 = vmul.f32 %v682, %v684
        %v686 = vadd.f32 %v682, %v685
        %vm687 = vweird.f32 %v682
        %v688 = vsel %vm687, %v682, %v686
        %v689 = vmul.f32 %v681, %v688
        %v690 = vsub.f32 %v669, %v689
        %v691 = vmul.f32 %v690, %v690
        %v692 = vsel %vm678, %v691, 0.0
        %693 = vadd.xlane.f32.xlu0 %v692
        %v694 = vpop.xlane.xlu0 %693
        %v695 = vmul.f32 %v694, %v688
        %v696 = vadd.f32 %v695, 1e-05
        %v697 = vrsqrt.pop %v696
        %v698 = vmul.f32 %v697, %v696
        %v699 = vmul.f32 %v698, %v697
        %v700 = vmul.f32 0.5, %v699
        %v701 = vsub.f32 1.5, %v700
        %v702 = vmul.f32 %v697, %v701
        %vm703 = vweird.f32 %v696
        %vm704 = vweird.f32 %v697
        %vm705 = vmor %vm703, %vm704
        %v706 = vsel %vm705, %v697, %v702
        %v707 = vmul.f32 %v690, %v706
        %v709 = vperm.slane %v672, 0
        %v711 = vmul.f32 %v707, %v709
        %v713 = vperm.slane %v673, 0
        %v715 = vadd.f32 %v711, %v713
        %v716 = vld [vmem:[%s6] sm:$0xff]
        %v717 = vld [vmem:[%s6 + $0x8] sm:$0xff]
        %v718 = vld [vmem:[%s6 + $0x10] sm:$0xff]
        %v719 = vld [vmem:[%s6 + $0x18] sm:$0xff]
        %v720 = vld [vmem:[%s7] sm:$0x1]
        %v722 = vperm.slane %v720, 0
        %v725 = vsel %vm678, %v715, 0
        %727 = vmatpush.msra.mxu0 0.0
        %728 = vmatpush.msra.mxu0 0.0
        %729 = vmatpush.msra.mxu0 0.0
        %730 = vmatpush.msra.mxu0 0.0
        %731 = vmatpush.msra.mxu0 0.0
        %732 = vmatpush.msra.mxu0 0.0
        %733 = vmatpush.msra.mxu0 0.0
        %734 = vmatpush.msra.mxu0 0.0
        %735 = vmatpush.msra.mxu0 0.0
        %736 = vmatpush.msra.mxu0 0.0
        %737 = vmatpush.msra.mxu0 0.0
        %738 = vmatpush.msra.mxu0 0.0
        %739 = vmatpush.msra.mxu0 %v719
        %740 = vmatpush.msra.mxu0 %v718
        %741 = vmatpush.msra.mxu0 %v717
        %742 = vmatpush.msra.mxu0 %v716
        %743 = vmatmul.f32.gmra.mxu0 %v725
        %v744 = vpop.f32.mrf.mxu0
        %v745 = vadd.f32 %v722, %v744
        %746 = vdwg.mxu0
        %748 = vrot.lane.b32.xlu0 %v745, 96
        %v749 = vpop.permute.xlu0 %748
        %vm750 = vcmask 64512
        %v751 = vsel %vm750, %v745, 0
        %v753 = vsel %vm750, %v749, 0
        %755 = vmatpush.xpose.msra.mxu0 0.0
        %756 = vmatpush.xpose.msra.mxu0 0.0
        %757 = vmatpush.xpose.msra.mxu0 0.0
        %758 = vmatpush.xpose.msra.mxu0 0.0
        %759 = vmatpush.xpose.msra.mxu0 0.0
        %760 = vmatpush.xpose.msra.mxu0 0.0
        %761 = vmatpush.xpose.msra.mxu0 0.0
        %762 = vmatpush.xpose.msra.mxu0 0.0
        %763 = vmatpush.xpose.msra.mxu0 0.0
        %764 = vmatpush.xpose.msra.mxu0 0.0
        %765 = vmatpush.xpose.msra.mxu0 0.0
        %766 = vmatpush.xpose.msra.mxu0 0.0
        %767 = vmatpush.xpose.msra.mxu0 0.0
        %768 = vmatpush.xpose.msra.mxu0 0.0
        %769 = vmatpush.xpose.msra.mxu0 0.0
        %770 = vmatpush.xpose.msra.mxu0 %v753
        %771 = vmatmul.f32.gmra.mxu0 %v751
        %v772 = vpop.f32.mrf.mxu0
        %v773 = vadd.f32 0.0, %v772
        %774 = vdwg.mxu0
        %v775 = vsel %vm675, 16843009, 0
        %v776 = vunpack.c.0.s8 %v775
        %vm777 = vcmp.ne.s32.totalorder %v776, 0
        %v778 = vsel %vm777, %v773, 1e-09
        %v779 = vsel %vm750, %v778, -inf
        %780 = vmax.xlane.f32.xlu0 %v779
        %v781 = vpop.xlane.xlu0 %780
        %v782 = vsub.f32 %v778, %v781
        %v783 = vmul.f32 %v782, 1.442695
        %v784 = vpow.pop %v783
        %v785 = vsel %vm750, %v784, 0.0
        %786 = vadd.xlane.f32.xlu0 %v785
        %v787 = vpop.xlane.xlu0 %786
        %v788 = vrcp.pop %v787
        %v789 = vmul.f32 %v787, %v788
        %v790 = vsub.f32 1.0, %v789
        %v791 = vmul.f32 %v788, %v790
        %v792 = vadd.f32 %v788, %v791
        %vm793 = vweird.f32 %v787
        %vm794 = vweird.f32 %v788
        %vm795 = vmor %vm793, %vm794
        %v796 = vsel %vm795, %v788, %v792
        %v797 = vand.u32 2147483647, %v787
        %vm798 = vcmp.eq.f32.partialorder %v797, 8.507059e+37
        %v799 = vand.u32 %v787, 2147483648
        %v800 = vor.u32 1.1754944e-38, %v799
        %v801 = vsel %vm798, %v800, %v796
        %v802 = vmul.f32 %v784, %v801
        %803 = vrot.lane.b32.xlu0 %v745, 64
        %v804 = vpop.permute.xlu0 %803
        %v807 = vsel %vm750, %v802, 0
        %809 = vmatpush.msra.mxu0 0.0
        %810 = vmatpush.msra.mxu0 0.0
        %811 = vmatpush.msra.mxu0 0.0
        %812 = vmatpush.msra.mxu0 0.0
        %813 = vmatpush.msra.mxu0 0.0
        %814 = vmatpush.msra.mxu0 0.0
        %815 = vmatpush.msra.mxu0 0.0
        %816 = vmatpush.msra.mxu0 0.0
        %817 = vmatpush.msra.mxu0 0.0
        %818 = vmatpush.msra.mxu0 0.0
        %819 = vmatpush.msra.mxu0 0.0
        %820 = vmatpush.msra.mxu0 0.0
        %821 = vmatpush.msra.mxu0 0.0
        %822 = vmatpush.msra.mxu0 0.0
        %823 = vmatpush.msra.mxu0 0.0
        %824 = vmatpush.msra.mxu0 %v804
        %825 = vmatmul.f32.gmra.mxu0 %v807
        %v826 = vpop.f32.mrf.mxu0
        %v827 = vadd.f32 0.0, %v826
        %828 = vdwg.mxu0
        %829 = vst.msk [vmem:[#allocation2] sm:$0xff] %vm750, %v827
        %830 = vrot.lane.b32.xlu0 %v745, 120
        %v831 = vpop.permute.xlu0 %830
        %832 = vrot.lane.b32.xlu0 %v745, 88
        %v833 = vpop.permute.xlu0 %832
        %v834 = vsel %vm750, %v831, 0
        %v836 = vsel %vm750, %v833, 0
        %838 = vmatpush.xpose.msra.mxu0 0.0
        %839 = vmatpush.xpose.msra.mxu0 0.0
        %840 = vmatpush.xpose.msra.mxu0 0.0
        %841 = vmatpush.xpose.msra.mxu0 0.0
        %842 = vmatpush.xpose.msra.mxu0 0.0
        %843 = vmatpush.xpose.msra.mxu0 0.0
        %844 = vmatpush.xpose.msra.mxu0 0.0
        %845 = vmatpush.xpose.msra.mxu0 0.0
        %846 = vmatpush.xpose.msra.mxu0 0.0
        %847 = vmatpush.xpose.msra.mxu0 0.0
        %848 = vmatpush.xpose.msra.mxu0 0.0
        %849 = vmatpush.xpose.msra.mxu0 0.0
        %850 = vmatpush.xpose.msra.mxu0 0.0
        %851 = vmatpush.xpose.msra.mxu0 0.0
        %852 = vmatpush.xpose.msra.mxu0 0.0
        %853 = vmatpush.xpose.msra.mxu0 %v836
        %854 = vmatmul.f32.gmra.mxu0 %v834
        %v855 = vpop.f32.mrf.mxu0
        %v856 = vadd.f32 0.0, %v855
        %857 = vdwg.mxu0
        %v858 = vsel %vm777, %v856, 1e-09
        %v859 = vsel %vm750, %v858, -inf
        %860 = vmax.xlane.f32.xlu0 %v859
        %v861 = vpop.xlane.xlu0 %860
        %v862 = vsub.f32 %v858, %v861
        %v863 = vmul.f32 %v862, 1.442695
        %v864 = vpow.pop %v863
        %v865 = vsel %vm750, %v864, 0.0
        %866 = vadd.xlane.f32.xlu0 %v865
        %v867 = vpop.xlane.xlu0 %866
        %v868 = vrcp.pop %v867
        %v869 = vmul.f32 %v867, %v868
        %v870 = vsub.f32 1.0, %v869
        %v871 = vmul.f32 %v868, %v870
        %v872 = vadd.f32 %v868, %v871
        %vm873 = vweird.f32 %v867
        %vm874 = vweird.f32 %v868
        %vm875 = vmor %vm873, %vm874
        %v876 = vsel %vm875, %v868, %v872
        %v877 = vand.u32 2147483647, %v867
        %vm878 = vcmp.eq.f32.partialorder %v877, 8.507059e+37
        %v879 = vand.u32 %v867, 2147483648
        %v880 = vor.u32 1.1754944e-38, %v879
        %v881 = vsel %vm878, %v880, %v876
        %v882 = vmul.f32 %v864, %v881
        %883 = vrot.lane.b32.xlu0 %v745, 56
        %v884 = vpop.permute.xlu0 %883
        %v887 = vsel %vm750, %v882, 0
        %889 = vmatpush.msra.mxu0 0.0
        %890 = vmatpush.msra.mxu0 0.0
        %891 = vmatpush.msra.mxu0 0.0
        %892 = vmatpush.msra.mxu0 0.0
        %893 = vmatpush.msra.mxu0 0.0
        %894 = vmatpush.msra.mxu0 0.0
        %895 = vmatpush.msra.mxu0 0.0
        %896 = vmatpush.msra.mxu0 0.0
        %897 = vmatpush.msra.mxu0 0.0
        %898 = vmatpush.msra.mxu0 0.0
        %899 = vmatpush.msra.mxu0 0.0
        %900 = vmatpush.msra.mxu0 0.0
        %901 = vmatpush.msra.mxu0 0.0
        %902 = vmatpush.msra.mxu0 0.0
        %903 = vmatpush.msra.mxu0 0.0
        %904 = vmatpush.msra.mxu0 %v884
        %905 = vmatmul.f32.gmra.mxu0 %v887
        %v906 = vpop.f32.mrf.mxu0
        %v907 = vadd.f32 0.0, %v906
        %908 = vdwg.mxu0
        %910 = vrot.lane.b32.xlu0 %v907, 8
        %v911 = vpop.permute.xlu0 %910
        %vm913 = vcmask 130112
        %914 = vst.msk [vmem:[#allocation2] sm:$0xff] %vm913, %v911
        %915 = vrot.lane.b32.xlu0 %v745, 112
        %v916 = vpop.permute.xlu0 %915
        %917 = vrot.lane.b32.xlu0 %v745, 80
        %v918 = vpop.permute.xlu0 %917
        %v919 = vsel %vm750, %v916, 0
        %v921 = vsel %vm750, %v918, 0
        %923 = vmatpush.xpose.msra.mxu0 0.0
        %924 = vmatpush.xpose.msra.mxu0 0.0
        %925 = vmatpush.xpose.msra.mxu0 0.0
        %926 = vmatpush.xpose.msra.mxu0 0.0
        %927 = vmatpush.xpose.msra.mxu0 0.0
        %928 = vmatpush.xpose.msra.mxu0 0.0
        %929 = vmatpush.xpose.msra.mxu0 0.0
        %930 = vmatpush.xpose.msra.mxu0 0.0
        %931 = vmatpush.xpose.msra.mxu0 0.0
        %932 = vmatpush.xpose.msra.mxu0 0.0
        %933 = vmatpush.xpose.msra.mxu0 0.0
        %934 = vmatpush.xpose.msra.mxu0 0.0
        %935 = vmatpush.xpose.msra.mxu0 0.0
        %936 = vmatpush.xpose.msra.mxu0 0.0
        %937 = vmatpush.xpose.msra.mxu0 0.0
        %938 = vmatpush.xpose.msra.mxu0 %v921
        %939 = vmatmul.f32.gmra.mxu0 %v919
        %v940 = vpop.f32.mrf.mxu0
        %v941 = vadd.f32 0.0, %v940
        %942 = vdwg.mxu0
        %v943 = vsel %vm777, %v941, 1e-09
        %v944 = vsel %vm750, %v943, -inf
        %945 = vmax.xlane.f32.xlu0 %v944
        %v946 = vpop.xlane.xlu0 %945
        %v947 = vsub.f32 %v943, %v946
        %v948 = vmul.f32 %v947, 1.442695
        %v949 = vpow.pop %v948
        %v950 = vsel %vm750, %v949, 0.0
        %951 = vadd.xlane.f32.xlu0 %v950
        %v952 = vpop.xlane.xlu0 %951
        %v953 = vrcp.pop %v952
        %v954 = vmul.f32 %v952, %v953
        %v955 = vsub.f32 1.0, %v954
        %v956 = vmul.f32 %v953, %v955
        %v957 = vadd.f32 %v953, %v956
        %vm958 = vweird.f32 %v952
        %vm959 = vweird.f32 %v953
        %vm960 = vmor %vm958, %vm959
        %v961 = vsel %vm960, %v953, %v957
        %v962 = vand.u32 2147483647, %v952
        %vm963 = vcmp.eq.f32.partialorder %v962, 8.507059e+37
        %v964 = vand.u32 %v952, 2147483648
        %v965 = vor.u32 1.1754944e-38, %v964
        %v966 = vsel %vm963, %v965, %v961
        %v967 = vmul.f32 %v949, %v966
        %968 = vrot.lane.b32.xlu0 %v745, 48
        %v969 = vpop.permute.xlu0 %968
        %v972 = vsel %vm750, %v967, 0
        %974 = vmatpush.msra.mxu0 0.0
        %975 = vmatpush.msra.mxu0 0.0
        %976 = vmatpush.msra.mxu0 0.0
        %977 = vmatpush.msra.mxu0 0.0
        %978 = vmatpush.msra.mxu0 0.0
        %979 = vmatpush.msra.mxu0 0.0
        %980 = vmatpush.msra.mxu0 0.0
        %981 = vmatpush.msra.mxu0 0.0
        %982 = vmatpush.msra.mxu0 0.0
        %983 = vmatpush.msra.mxu0 0.0
        %984 = vmatpush.msra.mxu0 0.0
        %985 = vmatpush.msra.mxu0 0.0
        %986 = vmatpush.msra.mxu0 0.0
        %987 = vmatpush.msra.mxu0 0.0
        %988 = vmatpush.msra.mxu0 0.0
        %989 = vmatpush.msra.mxu0 %v969
        %990 = vmatmul.f32.gmra.mxu0 %v972
        %v991 = vpop.f32.mrf.mxu0
        %v992 = vadd.f32 0.0, %v991
        %993 = vdwg.mxu0
        %995 = vrot.lane.b32.xlu0 %v992, 16
        %v996 = vpop.permute.xlu0 %995
        %vm998 = vcmask 195712
        %999 = vst.msk [vmem:[#allocation2] sm:$0xff] %vm998, %v996
        %1000 = vrot.lane.b32.xlu0 %v745, 104
        %v1001 = vpop.permute.xlu0 %1000
        %1002 = vrot.lane.b32.xlu0 %v745, 72
        %v1003 = vpop.permute.xlu0 %1002
        %v1004 = vsel %vm750, %v1001, 0
        %v1006 = vsel %vm750, %v1003, 0
        %1008 = vmatpush.xpose.msra.mxu0 0.0
        %1009 = vmatpush.xpose.msra.mxu0 0.0
        %1010 = vmatpush.xpose.msra.mxu0 0.0
        %1011 = vmatpush.xpose.msra.mxu0 0.0
        %1012 = vmatpush.xpose.msra.mxu0 0.0
        %1013 = vmatpush.xpose.msra.mxu0 0.0
        %1014 = vmatpush.xpose.msra.mxu0 0.0
        %1015 = vmatpush.xpose.msra.mxu0 0.0
        %1016 = vmatpush.xpose.msra.mxu0 0.0
        %1017 = vmatpush.xpose.msra.mxu0 0.0
        %1018 = vmatpush.xpose.msra.mxu0 0.0
        %1019 = vmatpush.xpose.msra.mxu0 0.0
        %1020 = vmatpush.xpose.msra.mxu0 0.0
        %1021 = vmatpush.xpose.msra.mxu0 0.0
        %1022 = vmatpush.xpose.msra.mxu0 0.0
        %1023 = vmatpush.xpose.msra.mxu0 %v1006
        %1024 = vmatmul.f32.gmra.mxu0 %v1004
        %v1025 = vpop.f32.mrf.mxu0
        %v1026 = vadd.f32 0.0, %v1025
        %1027 = vdwg.mxu0
        %v1028 = vsel %vm777, %v1026, 1e-09
        %v1029 = vsel %vm750, %v1028, -inf
        %1030 = vmax.xlane.f32.xlu0 %v1029
        %v1031 = vpop.xlane.xlu0 %1030
        %v1032 = vsub.f32 %v1028, %v1031
        %v1033 = vmul.f32 %v1032, 1.442695
        %v1034 = vpow.pop %v1033
        %v1035 = vsel %vm750, %v1034, 0.0
        %1036 = vadd.xlane.f32.xlu0 %v1035
        %v1037 = vpop.xlane.xlu0 %1036
        %v1038 = vrcp.pop %v1037
        %v1039 = vmul.f32 %v1037, %v1038
        %v1040 = vsub.f32 1.0, %v1039
        %v1041 = vmul.f32 %v1038, %v1040
        %v1042 = vadd.f32 %v1038, %v1041
        %vm1043 = vweird.f32 %v1037
        %vm1044 = vweird.f32 %v1038
        %vm1045 = vmor %vm1043, %vm1044
        %v1046 = vsel %vm1045, %v1038, %v1042
        %v1047 = vand.u32 2147483647, %v1037
        %vm1048 = vcmp.eq.f32.partialorder %v1047, 8.507059e+37
        %v1049 = vand.u32 %v1037, 2147483648
        %v1050 = vor.u32 1.1754944e-38, %v1049
        %v1051 = vsel %vm1048, %v1050, %v1046
        %v1052 = vmul.f32 %v1034, %v1051
        %1053 = vrot.lane.b32.xlu0 %v745, 40
        %v1054 = vpop.permute.xlu0 %1053
        %v1057 = vsel %vm750, %v1052, 0
        %1059 = vmatpush.msra.mxu0 0.0
        %1060 = vmatpush.msra.mxu0 0.0
        %1061 = vmatpush.msra.mxu0 0.0
        %1062 = vmatpush.msra.mxu0 0.0
        %1063 = vmatpush.msra.mxu0 0.0
        %1064 = vmatpush.msra.mxu0 0.0
        %1065 = vmatpush.msra.mxu0 0.0
        %1066 = vmatpush.msra.mxu0 0.0
        %1067 = vmatpush.msra.mxu0 0.0
        %1068 = vmatpush.msra.mxu0 0.0
        %1069 = vmatpush.msra.mxu0 0.0
        %1070 = vmatpush.msra.mxu0 0.0
        %1071 = vmatpush.msra.mxu0 0.0
        %1072 = vmatpush.msra.mxu0 0.0
        %1073 = vmatpush.msra.mxu0 0.0
        %1074 = vmatpush.msra.mxu0 %v1054
        %1075 = vmatmul.f32.gmra.mxu0 %v1057
        %v1076 = vpop.f32.mrf.mxu0
        %v1077 = vadd.f32 0.0, %v1076
        %1078 = vdwg.mxu0
        %1080 = vrot.lane.b32.xlu0 %v1077, 24
        %v1081 = vpop.permute.xlu0 %1080
        %vm1083 = vcmask 261312
        %1084 = vst.msk [vmem:[#allocation2] sm:$0xff] %vm1083, %v1081
        %v1085 = vld [vmem:[#allocation2] sm:$0xff]
        %v1086 = vadd.f32 %v1085, %v669
        %v1087 = vsel %vm678, %v1086, 0.0
        %1088 = vadd.xlane.f32.xlu0 %v1087
        %v1089 = vpop.xlane.xlu0 %1088
        %v1090 = vmul.f32 %v1089, %v688
        %v1091 = vsub.f32 %v1086, %v1090
        %v1092 = vmul.f32 %v1091, %v1091
        %v1093 = vsel %vm678, %v1092, 0.0
        %1094 = vadd.xlane.f32.xlu0 %v1093
        %v1095 = vpop.xlane.xlu0 %1094
        %v1096 = vmul.f32 %v1095, %v688
        %v1097 = vadd.f32 %v1096, 1e-05
        %v1098 = vrsqrt.pop %v1097
        %v1099 = vmul.f32 %v1098, %v1097
        %v1100 = vmul.f32 %v1099, %v1098
        %v1101 = vmul.f32 0.5, %v1100
        %v1102 = vsub.f32 1.5, %v1101
        %v1103 = vmul.f32 %v1098, %v1102
        %vm1104 = vweird.f32 %v1097
        %vm1105 = vweird.f32 %v1098
        %vm1106 = vmor %vm1104, %vm1105
        %v1107 = vsel %vm1106, %v1098, %v1103
        %v1108 = vmul.f32 %v1091, %v1107
        %v1109 = vmul.f32 %v1108, %v709
        %v1110 = vadd.f32 %v1109, %v713
        %v1111 = vsel %vm678, %v1110, 0.0
        %1112 = vadd.xlane.f32.xlu0 %v1111
        %v1113 = vpop.xlane.xlu0 %1112
        %v1114 = vmul.f32 %v1113, %v688
        %v1115 = vsub.f32 %v1110, %v1114
        %v1116 = vmul.f32 %v1115, %v1115
        %v1117 = vsel %vm678, %v1116, 0.0
        %1118 = vadd.xlane.f32.xlu0 %v1117
        %v1119 = vpop.xlane.xlu0 %1118
        %v1120 = vmul.f32 %v1119, %v688
        %v1121 = vadd.f32 %v1120, 1e-05
        %v1122 = vrsqrt.pop %v1121
        %v1123 = vmul.f32 %v1122, %v1121
        %v1124 = vmul.f32 %v1123, %v1122
        %v1125 = vmul.f32 0.5, %v1124
        %v1126 = vsub.f32 1.5, %v1125
        %v1127 = vmul.f32 %v1122, %v1126
        %vm1128 = vweird.f32 %v1121
        %vm1129 = vweird.f32 %v1122
        %vm1130 = vmor %vm1128, %vm1129
        %v1131 = vsel %vm1130, %v1122, %v1127
        %v1132 = vmul.f32 %v1115, %v1131
        %v1133 = vmul.f32 %v1132, %v709
        %v1134 = vadd.f32 %v1133, %v713
        %v1135 = vld [vmem:[%s8] sm:$0xff]
        %v1136 = vld [vmem:[%s8 + $0x8] sm:$0xff]
        %v1137 = vld [vmem:[%s8 + $0x10] sm:$0xff]
        %v1138 = vld [vmem:[%s8 + $0x18] sm:$0xff]
        %v1139 = vld [vmem:[%s9] sm:$0x1]
        %v1141 = vperm.slane %v1139, 0
        %v1144 = vsel %vm678, %v1134, 0
        %1146 = vmatpush.msra.mxu0 0.0
        %1147 = vmatpush.msra.mxu0 0.0
        %1148 = vmatpush.msra.mxu0 0.0
        %1149 = vmatpush.msra.mxu0 0.0
        %1150 = vmatpush.msra.mxu0 0.0
        %1151 = vmatpush.msra.mxu0 0.0
        %1152 = vmatpush.msra.mxu0 0.0
        %1153 = vmatpush.msra.mxu0 0.0
        %1154 = vmatpush.msra.mxu0 0.0
        %1155 = vmatpush.msra.mxu0 0.0
        %1156 = vmatpush.msra.mxu0 0.0
        %1157 = vmatpush.msra.mxu0 0.0
        %1158 = vmatpush.msra.mxu0 %v1138
        %1159 = vmatpush.msra.mxu0 %v1137
        %1160 = vmatpush.msra.mxu0 %v1136
        %1161 = vmatpush.msra.mxu0 %v1135
        %1162 = vmatmul.f32.gmra.mxu0 %v1144
        %v1163 = vpop.f32.mrf.mxu0
        %v1164 = vadd.f32 %v1141, %v1163
        %1165 = vdwg.mxu0
        %v1166 = vld [vmem:[#allocation9] sm:$0xff]
        %v1167 = vld [vmem:[#allocation9 + $0x8] sm:$0xff]
        %v1168 = vld [vmem:[#allocation9 + $0x10] sm:$0xff]
        %v1169 = vld [vmem:[#allocation9 + $0x18] sm:$0xff]
        %v1170 = vld [vmem:[%s11] sm:$0x1]
        %v1172 = vperm.slane %v1170, 0
        %v1175 = vsel %vm678, %v670, 0
        %v1178 = vsel %vm678, %v671, 0
        %1180 = vmatpush.msra.mxu0 0.0
        %1181 = vmatpush.msra.mxu0 0.0
        %1182 = vmatpush.msra.mxu0 0.0
        %1183 = vmatpush.msra.mxu0 0.0
        %1184 = vmatpush.msra.mxu0 0.0
        %1185 = vmatpush.msra.mxu0 0.0
        %1186 = vmatpush.msra.mxu0 0.0
        %1187 = vmatpush.msra.mxu0 0.0
        %1188 = vmatpush.msra.mxu0 0.0
        %1189 = vmatpush.msra.mxu0 0.0
        %1190 = vmatpush.msra.mxu0 0.0
        %1191 = vmatpush.msra.mxu0 0.0
        %1192 = vmatpush.msra.mxu0 %v1169
        %1193 = vmatpush.msra.mxu0 %v1168
        %1194 = vmatpush.msra.mxu0 %v1167
        %1195 = vmatpush.msra.mxu0 %v1166
        %1196 = vmatmul.f32.gmra.mxu0 %v1175
        %v1197 = vpop.f32.mrf.mxu0
        %v1198 = vadd.f32 %v1172, %v1197
        %1199 = vmatmul.f32.gmra.mxu0 %v1178
        %v1200 = vpop.f32.mrf.mxu0
        %v1201 = vadd.f32 %v1172, %v1200
        %1202 = vdwg.mxu0
        %v1204 = vsel %vm750, %v1164, 0
        %v1207 = vsel %vm750, %v1198, 0
        %v1210 = vsel %vm750, %v1201, 0
        %1212 = vmatpush.xpose.msra.mxu0 0.0
        %1213 = vmatpush.xpose.msra.mxu0 0.0
        %1214 = vmatpush.xpose.msra.mxu0 0.0
        %1215 = vmatpush.xpose.msra.mxu0 0.0
        %1216 = vmatpush.xpose.msra.mxu0 0.0
        %1217 = vmatpush.xpose.msra.mxu0 0.0
        %1218 = vmatpush.xpose.msra.mxu0 0.0
        %1219 = vmatpush.xpose.msra.mxu0 0.0
        %1220 = vmatpush.xpose.msra.mxu0 0.0
        %1221 = vmatpush.xpose.msra.mxu0 0.0
        %1222 = vmatpush.xpose.msra.mxu0 0.0
        %1223 = vmatpush.xpose.msra.mxu0 0.0
        %1224 = vmatpush.xpose.msra.mxu0 0.0
        %1225 = vmatpush.xpose.msra.mxu0 0.0
        %1226 = vmatpush.xpose.msra.mxu0 %v1210
        %1227 = vmatpush.xpose.msra.mxu0 %v1207
        %1228 = vmatmul.f32.gmra.mxu0 %v1204
        %v1229 = vpop.f32.mrf.mxu0
        %v1230 = vadd.f32 0.0, %v1229
        %1231 = vdwg.mxu0
        %v1232 = vsel %vm677, 16843009, 0
        %v1233 = vunpack.c.0.s8 %v1232
        %vm1234 = vcmp.ne.s32.totalorder %v1233, 0
        %v1235 = vsel %vm1234, %v1230, 1e-09
        %vm1236 = vcmask 130048
        %v1237 = vsel %vm1236, %v1235, -inf
        %1238 = vmax.xlane.f32.xlu0 %v1237
        %v1239 = vpop.xlane.xlu0 %1238
        %v1240 = vsub.f32 %v1235, %v1239
        %v1241 = vmul.f32 %v1240, 1.442695
        %v1242 = vpow.pop %v1241
        %v1243 = vsel %vm1236, %v1242, 0.0
        %1244 = vadd.xlane.f32.xlu0 %v1243
        %v1245 = vpop.xlane.xlu0 %1244
        %v1246 = vrcp.pop %v1245
        %v1247 = vmul.f32 %v1245, %v1246
        %v1248 = vsub.f32 1.0, %v1247
        %v1249 = vmul.f32 %v1246, %v1248
        %v1250 = vadd.f32 %v1246, %v1249
        %vm1251 = vweird.f32 %v1245
        %vm1252 = vweird.f32 %v1246
        %vm1253 = vmor %vm1251, %vm1252
        %v1254 = vsel %vm1253, %v1246, %v1250
        %v1255 = vand.u32 2147483647, %v1245
        %vm1256 = vcmp.eq.f32.partialorder %v1255, 8.507059e+37
        %v1257 = vand.u32 %v1245, 2147483648
        %v1258 = vor.u32 1.1754944e-38, %v1257
        %v1259 = vsel %vm1256, %v1258, %v1254
        %v1260 = vmul.f32 %v1242, %v1259
        %1261 = vrot.lane.b32.xlu0 %v1198, 96
        %v1262 = vpop.permute.xlu0 %1261
        %1263 = vrot.lane.b32.xlu0 %v1201, 96
        %v1264 = vpop.permute.xlu0 %1263
        %v1268 = vsel %vm1236, %v1260, 0
        %1270 = vmatpush.msra.mxu0 0.0
        %1271 = vmatpush.msra.mxu0 0.0
        %1272 = vmatpush.msra.mxu0 0.0
        %1273 = vmatpush.msra.mxu0 0.0
        %1274 = vmatpush.msra.mxu0 0.0
        %1275 = vmatpush.msra.mxu0 0.0
        %1276 = vmatpush.msra.mxu0 0.0
        %1277 = vmatpush.msra.mxu0 0.0
        %1278 = vmatpush.msra.mxu0 0.0
        %1279 = vmatpush.msra.mxu0 0.0
        %1280 = vmatpush.msra.mxu0 0.0
        %1281 = vmatpush.msra.mxu0 0.0
        %1282 = vmatpush.msra.mxu0 0.0
        %1283 = vmatpush.msra.mxu0 0.0
        %1284 = vmatpush.msra.mxu0 %v1264
        %1285 = vmatpush.msra.mxu0 %v1262
        %1286 = vmatmul.f32.gmra.mxu0 %v1268
        %v1287 = vpop.f32.mrf.mxu0
        %v1288 = vadd.f32 0.0, %v1287
        %1289 = vdwg.mxu0
        %1290 = vst.msk [vmem:[#allocation2] sm:$0xff] %vm750, %v1288
        %1291 = vrot.lane.b32.xlu0 %v1164, 120
        %v1292 = vpop.permute.xlu0 %1291
        %1293 = vrot.lane.b32.xlu0 %v1198, 120
        %v1294 = vpop.permute.xlu0 %1293
        %1295 = vrot.lane.b32.xlu0 %v1201, 120
        %v1296 = vpop.permute.xlu0 %1295
        %v1297 = vsel %vm750, %v1292, 0
        %v1299 = vsel %vm750, %v1294, 0
        %v1301 = vsel %vm750, %v1296, 0
        %1303 = vmatpush.xpose.msra.mxu0 0.0
        %1304 = vmatpush.xpose.msra.mxu0 0.0
        %1305 = vmatpush.xpose.msra.mxu0 0.0
        %1306 = vmatpush.xpose.msra.mxu0 0.0
        %1307 = vmatpush.xpose.msra.mxu0 0.0
        %1308 = vmatpush.xpose.msra.mxu0 0.0
        %1309 = vmatpush.xpose.msra.mxu0 0.0
        %1310 = vmatpush.xpose.msra.mxu0 0.0
        %1311 = vmatpush.xpose.msra.mxu0 0.0
        %1312 = vmatpush.xpose.msra.mxu0 0.0
        %1313 = vmatpush.xpose.msra.mxu0 0.0
        %1314 = vmatpush.xpose.msra.mxu0 0.0
        %1315 = vmatpush.xpose.msra.mxu0 0.0
        %1316 = vmatpush.xpose.msra.mxu0 0.0
        %1317 = vmatpush.xpose.msra.mxu0 %v1301
        %1318 = vmatpush.xpose.msra.mxu0 %v1299
        %1319 = vmatmul.f32.gmra.mxu0 %v1297
        %v1320 = vpop.f32.mrf.mxu0
        %v1321 = vadd.f32 0.0, %v1320
        %1322 = vdwg.mxu0
        %v1323 = vsel %vm1234, %v1321, 1e-09
        %v1324 = vsel %vm1236, %v1323, -inf
        %1325 = vmax.xlane.f32.xlu0 %v1324
        %v1326 = vpop.xlane.xlu0 %1325
        %v1327 = vsub.f32 %v1323, %v1326
        %v1328 = vmul.f32 %v1327, 1.442695
        %v1329 = vpow.pop %v1328
        %v1330 = vsel %vm1236, %v1329, 0.0
        %1331 = vadd.xlane.f32.xlu0 %v1330
        %v1332 = vpop.xlane.xlu0 %1331
        %v1333 = vrcp.pop %v1332
        %v1334 = vmul.f32 %v1332, %v1333
        %v1335 = vsub.f32 1.0, %v1334
        %v1336 = vmul.f32 %v1333, %v1335
        %v1337 = vadd.f32 %v1333, %v1336
        %vm1338 = vweird.f32 %v1332
        %vm1339 = vweird.f32 %v1333
        %vm1340 = vmor %vm1338, %vm1339
        %v1341 = vsel %vm1340, %v1333, %v1337
        %v1342 = vand.u32 2147483647, %v1332
        %vm1343 = vcmp.eq.f32.partialorder %v1342, 8.507059e+37
        %v1344 = vand.u32 %v1332, 2147483648
        %v1345 = vor.u32 1.1754944e-38, %v1344
        %v1346 = vsel %vm1343, %v1345, %v1341
        %v1347 = vmul.f32 %v1329, %v1346
        %1348 = vrot.lane.b32.xlu0 %v1198, 88
        %v1349 = vpop.permute.xlu0 %1348
        %1350 = vrot.lane.b32.xlu0 %v1201, 88
        %v1351 = vpop.permute.xlu0 %1350
        %v1355 = vsel %vm1236, %v1347, 0
        %1357 = vmatpush.msra.mxu0 0.0
        %1358 = vmatpush.msra.mxu0 0.0
        %1359 = vmatpush.msra.mxu0 0.0
        %1360 = vmatpush.msra.mxu0 0.0
        %1361 = vmatpush.msra.mxu0 0.0
        %1362 = vmatpush.msra.mxu0 0.0
        %1363 = vmatpush.msra.mxu0 0.0
        %1364 = vmatpush.msra.mxu0 0.0
        %1365 = vmatpush.msra.mxu0 0.0
        %1366 = vmatpush.msra.mxu0 0.0
        %1367 = vmatpush.msra.mxu0 0.0
        %1368 = vmatpush.msra.mxu0 0.0
        %1369 = vmatpush.msra.mxu0 0.0
        %1370 = vmatpush.msra.mxu0 0.0
        %1371 = vmatpush.msra.mxu0 %v1351
        %1372 = vmatpush.msra.mxu0 %v1349
        %1373 = vmatmul.f32.gmra.mxu0 %v1355
        %v1374 = vpop.f32.mrf.mxu0
        %v1375 = vadd.f32 0.0, %v1374
        %1376 = vdwg.mxu0
        %1378 = vrot.lane.b32.xlu0 %v1375, 8
        %v1379 = vpop.permute.xlu0 %1378
        %1381 = vst.msk [vmem:[#allocation2] sm:$0xff] %vm913, %v1379
        %1382 = vrot.lane.b32.xlu0 %v1164, 112
        %v1383 = vpop.permute.xlu0 %1382
        %1384 = vrot.lane.b32.xlu0 %v1198, 112
        %v1385 = vpop.permute.xlu0 %1384
        %1386 = vrot.lane.b32.xlu0 %v1201, 112
        %v1387 = vpop.permute.xlu0 %1386
        %v1388 = vsel %vm750, %v1383, 0
        %v1390 = vsel %vm750, %v1385, 0
        %v1392 = vsel %vm750, %v1387, 0
        %1394 = vmatpush.xpose.msra.mxu0 0.0
        %1395 = vmatpush.xpose.msra.mxu0 0.0
        %1396 = vmatpush.xpose.msra.mxu0 0.0
        %1397 = vmatpush.xpose.msra.mxu0 0.0
        %1398 = vmatpush.xpose.msra.mxu0 0.0
        %1399 = vmatpush.xpose.msra.mxu0 0.0
        %1400 = vmatpush.xpose.msra.mxu0 0.0
        %1401 = vmatpush.xpose.msra.mxu0 0.0
        %1402 = vmatpush.xpose.msra.mxu0 0.0
        %1403 = vmatpush.xpose.msra.mxu0 0.0
        %1404 = vmatpush.xpose.msra.mxu0 0.0
        %1405 = vmatpush.xpose.msra.mxu0 0.0
        %1406 = vmatpush.xpose.msra.mxu0 0.0
        %1407 = vmatpush.xpose.msra.mxu0 0.0
        %1408 = vmatpush.xpose.msra.mxu0 %v1392
        %1409 = vmatpush.xpose.msra.mxu0 %v1390
        %1410 = vmatmul.f32.gmra.mxu0 %v1388
        %v1411 = vpop.f32.mrf.mxu0
        %v1412 = vadd.f32 0.0, %v1411
        %1413 = vdwg.mxu0
        %v1414 = vsel %vm1234, %v1412, 1e-09
        %v1415 = vsel %vm1236, %v1414, -inf
        %1416 = vmax.xlane.f32.xlu0 %v1415
        %v1417 = vpop.xlane.xlu0 %1416
        %v1418 = vsub.f32 %v1414, %v1417
        %v1419 = vmul.f32 %v1418, 1.442695
        %v1420 = vpow.pop %v1419
        %v1421 = vsel %vm1236, %v1420, 0.0
        %1422 = vadd.xlane.f32.xlu0 %v1421
        %v1423 = vpop.xlane.xlu0 %1422
        %v1424 = vrcp.pop %v1423
        %v1425 = vmul.f32 %v1423, %v1424
        %v1426 = vsub.f32 1.0, %v1425
        %v1427 = vmul.f32 %v1424, %v1426
        %v1428 = vadd.f32 %v1424, %v1427
        %vm1429 = vweird.f32 %v1423
        %vm1430 = vweird.f32 %v1424
        %vm1431 = vmor %vm1429, %vm1430
        %v1432 = vsel %vm1431, %v1424, %v1428
        %v1433 = vand.u32 2147483647, %v1423
        %vm1434 = vcmp.eq.f32.partialorder %v1433, 8.507059e+37
        %v1435 = vand.u32 %v1423, 2147483648
        %v1436 = vor.u32 1.1754944e-38, %v1435
        %v1437 = vsel %vm1434, %v1436, %v1432
        %v1438 = vmul.f32 %v1420, %v1437
        %1439 = vrot.lane.b32.xlu0 %v1198, 80
        %v1440 = vpop.permute.xlu0 %1439
        %1441 = vrot.lane.b32.xlu0 %v1201, 80
        %v1442 = vpop.permute.xlu0 %1441
        %v1446 = vsel %vm1236, %v1438, 0
        %1448 = vmatpush.msra.mxu0 0.0
        %1449 = vmatpush.msra.mxu0 0.0
        %1450 = vmatpush.msra.mxu0 0.0
        %1451 = vmatpush.msra.mxu0 0.0
        %1452 = vmatpush.msra.mxu0 0.0
        %1453 = vmatpush.msra.mxu0 0.0
        %1454 = vmatpush.msra.mxu0 0.0
        %1455 = vmatpush.msra.mxu0 0.0
        %1456 = vmatpush.msra.mxu0 0.0
        %1457 = vmatpush.msra.mxu0 0.0
        %1458 = vmatpush.msra.mxu0 0.0
        %1459 = vmatpush.msra.mxu0 0.0
        %1460 = vmatpush.msra.mxu0 0.0
        %1461 = vmatpush.msra.mxu0 0.0
        %1462 = vmatpush.msra.mxu0 %v1442
        %1463 = vmatpush.msra.mxu0 %v1440
        %1464 = vmatmul.f32.gmra.mxu0 %v1446
        %v1465 = vpop.f32.mrf.mxu0
        %v1466 = vadd.f32 0.0, %v1465
        %1467 = vdwg.mxu0
        %1469 = vrot.lane.b32.xlu0 %v1466, 16
        %v1470 = vpop.permute.xlu0 %1469
        %1472 = vst.msk [vmem:[#allocation2] sm:$0xff] %vm998, %v1470
        %1473 = vrot.lane.b32.xlu0 %v1164, 104
        %v1474 = vpop.permute.xlu0 %1473
        %1475 = vrot.lane.b32.xlu0 %v1198, 104
        %v1476 = vpop.permute.xlu0 %1475
        %1477 = vrot.lane.b32.xlu0 %v1201, 104
        %v1478 = vpop.permute.xlu0 %1477
        %v1479 = vsel %vm750, %v1474, 0
        %v1481 = vsel %vm750, %v1476, 0
        %v1483 = vsel %vm750, %v1478, 0
        %1485 = vmatpush.xpose.msra.mxu0 0.0
        %1486 = vmatpush.xpose.msra.mxu0 0.0
        %1487 = vmatpush.xpose.msra.mxu0 0.0
        %1488 = vmatpush.xpose.msra.mxu0 0.0
        %1489 = vmatpush.xpose.msra.mxu0 0.0
        %1490 = vmatpush.xpose.msra.mxu0 0.0
        %1491 = vmatpush.xpose.msra.mxu0 0.0
        %1492 = vmatpush.xpose.msra.mxu0 0.0
        %1493 = vmatpush.xpose.msra.mxu0 0.0
        %1494 = vmatpush.xpose.msra.mxu0 0.0
        %1495 = vmatpush.xpose.msra.mxu0 0.0
        %1496 = vmatpush.xpose.msra.mxu0 0.0
        %1497 = vmatpush.xpose.msra.mxu0 0.0
        %1498 = vmatpush.xpose.msra.mxu0 0.0
        %1499 = vmatpush.xpose.msra.mxu0 %v1483
        %1500 = vmatpush.xpose.msra.mxu0 %v1481
        %1501 = vmatmul.f32.gmra.mxu0 %v1479
        %v1502 = vpop.f32.mrf.mxu0
        %v1503 = vadd.f32 0.0, %v1502
        %1504 = vdwg.mxu0
        %v1505 = vsel %vm1234, %v1503, 1e-09
        %v1506 = vsel %vm1236, %v1505, -inf
        %1507 = vmax.xlane.f32.xlu0 %v1506
        %v1508 = vpop.xlane.xlu0 %1507
        %v1509 = vsub.f32 %v1505, %v1508
        %v1510 = vmul.f32 %v1509, 1.442695
        %v1511 = vpow.pop %v1510
        %v1512 = vsel %vm1236, %v1511, 0.0
        %1513 = vadd.xlane.f32.xlu0 %v1512
        %v1514 = vpop.xlane.xlu0 %1513
        %v1515 = vrcp.pop %v1514
        %v1516 = vmul.f32 %v1514, %v1515
        %v1517 = vsub.f32 1.0, %v1516
        %v1518 = vmul.f32 %v1515, %v1517
        %v1519 = vadd.f32 %v1515, %v1518
        %vm1520 = vweird.f32 %v1514
        %vm1521 = vweird.f32 %v1515
        %vm1522 = vmor %vm1520, %vm1521
        %v1523 = vsel %vm1522, %v1515, %v1519
        %v1524 = vand.u32 2147483647, %v1514
        %vm1525 = vcmp.eq.f32.partialorder %v1524, 8.507059e+37
        %v1526 = vand.u32 %v1514, 2147483648
        %v1527 = vor.u32 1.1754944e-38, %v1526
        %v1528 = vsel %vm1525, %v1527, %v1523
        %v1529 = vmul.f32 %v1511, %v1528
        %1530 = vrot.lane.b32.xlu0 %v1198, 72
        %v1531 = vpop.permute.xlu0 %1530
        %1532 = vrot.lane.b32.xlu0 %v1201, 72
        %v1533 = vpop.permute.xlu0 %1532
        %v1537 = vsel %vm1236, %v1529, 0
        %1539 = vmatpush.msra.mxu0 0.0
        %1540 = vmatpush.msra.mxu0 0.0
        %1541 = vmatpush.msra.mxu0 0.0
        %1542 = vmatpush.msra.mxu0 0.0
        %1543 = vmatpush.msra.mxu0 0.0
        %1544 = vmatpush.msra.mxu0 0.0
        %1545 = vmatpush.msra.mxu0 0.0
        %1546 = vmatpush.msra.mxu0 0.0
        %1547 = vmatpush.msra.mxu0 0.0
        %1548 = vmatpush.msra.mxu0 0.0
        %1549 = vmatpush.msra.mxu0 0.0
        %1550 = vmatpush.msra.mxu0 0.0
        %1551 = vmatpush.msra.mxu0 0.0
        %1552 = vmatpush.msra.mxu0 0.0
        %1553 = vmatpush.msra.mxu0 %v1533
        %1554 = vmatpush.msra.mxu0 %v1531
        %1555 = vmatmul.f32.gmra.mxu0 %v1537
        %v1556 = vpop.f32.mrf.mxu0
        %v1557 = vadd.f32 0.0, %v1556
        %1558 = vdwg.mxu0
        %1560 = vrot.lane.b32.xlu0 %v1557, 24
        %v1561 = vpop.permute.xlu0 %1560
        %1563 = vst.msk [vmem:[#allocation2] sm:$0xff] %vm1083, %v1561
        %v1564 = vld [vmem:[#allocation2] sm:$0xff]
        %v1565 = vadd.f32 %v1564, %v1110
        %v1566 = vsel %vm678, %v1565, 0.0
        %1567 = vadd.xlane.f32.xlu0 %v1566
        %v1568 = vpop.xlane.xlu0 %1567
        %v1569 = vmul.f32 %v1568, %v688
        %v1570 = vsub.f32 %v1565, %v1569
        %v1571 = vmul.f32 %v1570, %v1570
        %v1572 = vsel %vm678, %v1571, 0.0
        %1573 = vadd.xlane.f32.xlu0 %v1572
        %v1574 = vpop.xlane.xlu0 %1573
        %v1575 = vmul.f32 %v1574, %v688
        %v1576 = vadd.f32 %v1575, 1e-05
        %v1577 = vrsqrt.pop %v1576
        %v1578 = vmul.f32 %v1577, %v1576
        %v1579 = vmul.f32 %v1578, %v1577
        %v1580 = vmul.f32 0.5, %v1579
        %v1581 = vsub.f32 1.5, %v1580
        %v1582 = vmul.f32 %v1577, %v1581
        %vm1583 = vweird.f32 %v1576
        %vm1584 = vweird.f32 %v1577
        %vm1585 = vmor %vm1583, %vm1584
        %v1586 = vsel %vm1585, %v1577, %v1582
        %v1587 = vmul.f32 %v1570, %v1586
        %v1588 = vmul.f32 %v1587, %v709
        %v1589 = vadd.f32 %v1588, %v713
        %v1590 = vld [vmem:[#allocation11] sm:$0xff]
        %v1591 = vld [vmem:[#allocation11 + $0x8] sm:$0xff]
        %v1592 = vld [vmem:[#allocation11 + $0x10] sm:$0xff]
        %v1593 = vld [vmem:[#allocation11 + $0x18] sm:$0xff]
        %v1594 = vld [vmem:[%s13] sm:$0x1]
        %v1596 = vperm.slane %v1594, 0
        %v1599 = vsel %vm678, %v1589, 0
        %1601 = vmatpush.msra.mxu0 0.0
        %1602 = vmatpush.msra.mxu0 0.0
        %1603 = vmatpush.msra.mxu0 0.0
        %1604 = vmatpush.msra.mxu0 0.0
        %1605 = vmatpush.msra.mxu0 0.0
        %1606 = vmatpush.msra.mxu0 0.0
        %1607 = vmatpush.msra.mxu0 0.0
        %1608 = vmatpush.msra.mxu0 0.0
        %1609 = vmatpush.msra.mxu0 0.0
        %1610 = vmatpush.msra.mxu0 0.0
        %1611 = vmatpush.msra.mxu0 0.0
        %1612 = vmatpush.msra.mxu0 0.0
        %1613 = vmatpush.msra.mxu0 %v1593
        %1614 = vmatpush.msra.mxu0 %v1592
        %1615 = vmatpush.msra.mxu0 %v1591
        %1616 = vmatpush.msra.mxu0 %v1590
        %1617 = vmatmul.f32.gmra.mxu0 %v1599
        %v1618 = vpop.f32.mrf.mxu0
        %v1619 = vadd.f32 %v1596, %v1618
        %1620 = vdwg.mxu0
        %v1621 = vmul.f32 %v1619, 0.5
        %v1622 = vmul.f32 %v1619, 0.70710677
        %v1623 = vand.u32 2147483647, %v1622
        %v1624 = vmul.f32 %v1623, 0.3275911
        %v1625 = vadd.f32 %v1624, 1.0
        %v1626 = vrcp.pop %v1625
        %v1627 = vmul.f32 %v1625, %v1626
        %v1628 = vsub.f32 1.0, %v1627
        %v1629 = vmul.f32 %v1626, %v1628
        %v1630 = vadd.f32 %v1626, %v1629
        %vm1631 = vweird.f32 %v1625
        %vm1632 = vweird.f32 %v1626
        %vm1633 = vmor %vm1631, %vm1632
        %v1634 = vsel %vm1633, %v1626, %v1630
        %v1635 = vand.u32 2147483647, %v1625
        %vm1636 = vcmp.eq.f32.partialorder %v1635, 8.507059e+37
        %v1637 = vand.u32 %v1625, 2147483648
        %v1638 = vor.u32 1.1754944e-38, %v1637
        %v1639 = vsel %vm1636, %v1638, %v1634
        %v1640 = vmul.f32 1.0, %v1639
        %v1641 = vmul.f32 %v1640, 1.0614054
        %v1642 = vadd.f32 %v1641, -1.4531521
        %v1643 = vmul.f32 %v1642, %v1640
        %v1644 = vadd.f32 %v1643, 1.4214138
        %v1645 = vmul.f32 %v1644, %v1640
        %v1646 = vadd.f32 %v1645, -0.28449672
        %v1647 = vmul.f32 %v1646, %v1640
        %v1648 = vadd.f32 %v1647, 0.2548296
        %v1649 = vmul.f32 %v1648, %v1640
        %v1650 = vsub.f32 0.0, %v1623
        %v1651 = vmul.f32 %v1650, %v1623
        %v1652 = vmul.f32 %v1651, 1.442695
        %v1653 = vpow.pop %v1652
        %v1654 = vmul.f32 %v1649, %v1653
        %v1655 = vsub.f32 1.0, %v1654
        %vm1656 = vcmp.ge.f32.partialorder %v1622, 0.0
        %v1657 = vsub.f32 0.0, %v1655
        %v1658 = vsel %vm1656, %v1655, %v1657
        %v1659 = vadd.f32 %v1658, 1.0
        %v1660 = vmul.f32 %v1621, %v1659
        %v1661 = vld [vmem:[%s14] sm:$0xff]
        %v1662 = vld [vmem:[%s14 + $0x8] sm:$0xff]
        %v1663 = vld [vmem:[%s14 + $0x10] sm:$0xff]
        %v1664 = vld [vmem:[%s14 + $0x18] sm:$0xff]
        %v1665 = vld [vmem:[%s14 + $0x20] sm:$0xff]
        %v1666 = vld [vmem:[%s14 + $0x28] sm:$0xff]
        %v1667 = vld [vmem:[%s14 + $0x30] sm:$0xff]
        %v1668 = vld [vmem:[%s14 + $0x38] sm:$0xff]
        %vm1669 = vcmask 523264
        %v1671 = vsel %vm1669, %v1660, 0
        %1673 = vmatpush.msra.mxu0 0.0
        %1674 = vmatpush.msra.mxu0 0.0
        %1675 = vmatpush.msra.mxu0 0.0
        %1676 = vmatpush.msra.mxu0 0.0
        %1677 = vmatpush.msra.mxu0 0.0
        %1678 = vmatpush.msra.mxu0 0.0
        %1679 = vmatpush.msra.mxu0 0.0
        %1680 = vmatpush.msra.mxu0 0.0
        %1681 = vmatpush.msra.mxu0 %v1668
        %1682 = vmatpush.msra.mxu0 %v1667
        %1683 = vmatpush.msra.mxu0 %v1666
        %1684 = vmatpush.msra.mxu0 %v1665
        %1685 = vmatpush.msra.mxu0 %v1664
        %1686 = vmatpush.msra.mxu0 %v1663
        %1687 = vmatpush.msra.mxu0 %v1662
        %1688 = vmatpush.msra.mxu0 %v1661
        %1689 = vmatmul.f32.gmra.mxu0 %v1671
        %v1690 = vpop.f32.mrf.mxu0
        %v1691 = vadd.f32 0.0, %v1690
        %1692 = vdwg.mxu0
        %v1693 = vadd.f32 %v1589, %v1691
        %v1694 = vld [vmem:[%s15] sm:$0x1]
        %v1696 = vperm.slane %v1694, 0
        %v1698 = vadd.f32 %v1693, %v1696
        %1699 = vst.msk [vmem:[%s661] sm:$0xff] %vm678, %v1698
        %s1700 = sand.u32 %s401, 1
        %s1701 = scalar_lea.sflag [#allocation5], %s1700
        %s1702 = sand.u32 %s401, 1
        %s1703 = smul.addr %s1702, 8
        %s1704 = scalar_lea.vmem [#allocation12], %s1703
        // Predicated region
        $region105: #{tpu_custom_call.1} parent=83 // pred_check
          %p1705 = pneg %p411
        $region106: #{tpu_custom_call.1} parent=83 // pred_check_branch
          %1707 = sbr.rel (%p1705) target = $region108
        $region107: #{tpu_custom_call.1} parent=83 // pred_region
          %1709 = vsyncadd %s1701, 0
          %s1710 = smul.addr %s37, 8
          %s1711 = scalar_lea.hbm %s16, %s1710
          %s1713 = sshll.u32 %s1704, 4
          %s1714 = int_to_ptr.vmem [resolvable:$true] %s1713
          %s1715 = sshll.u32 %s1711, 4
          %s1716 = int_to_ptr.hbm [resolvable:$true] %s1715
          %1718 = dma.vmem_to_hbm [thread:$0]  %s1714, 128, %s1716, %s1701
        $region108: #{tpu_custom_call.1} parent=83 // pred_fallthru
          _
      $region84: #{tpu_custom_call.1} parent=5 // pred_fallthru
        _
      %p1719 = scmp.le.s32.totalorder 2, %s32
      // Predicated region
      $region109: #{tpu_custom_call.1} parent=5 // pred_check
        %p1720 = pneg %p1719
      $region110: #{tpu_custom_call.1} parent=5 // pred_check_branch
        %1722 = sbr.rel (%p1720) target = $region112
      $region111: #{tpu_custom_call.1} parent=5 // pred_region
        %s1723 = ssub.s32 %s32, 2
        // Predicated region
        $region113: #{tpu_custom_call.1} parent=111 // pred_check
          %p1724 = pneg %p417
        $region114: #{tpu_custom_call.1} parent=111 // pred_check_branch
          %1726 = sbr.rel (%p1724) target = $region116
        $region115: #{tpu_custom_call.1} parent=111 // pred_region
          %s1727 = sand.u32 %s402, 1
          %s1728 = scalar_lea.sflag [#allocation5], %s1727
          %s1729 = sand.u32 %s402, 1
          %s1730 = smul.addr %s1729, 8
          %s1731 = scalar_lea.vmem [#allocation12], %s1730
          %1733 = dma.done %s1728, 128
        $region116: #{tpu_custom_call.1} parent=111 // pred_fallthru
          _
      $region112: #{tpu_custom_call.1} parent=5 // pred_fallthru
        _
    $region6: #{tpu_custom_call.1} parent=1 // loop_footer
      %s36 = sadd.s32 1, %s32
    $region7: #{tpu_custom_call.1} parent=1 // loop_footer_branch
      %31 = sbr.rel target = $region3
    $region8: #{tpu_custom_call.1} parent=1 // loop_exit
      _
    %1734 = vsyncpa [#allocation4], 1
    %s1735 = scalar_lea.sflag [#allocation4], 1
    %1736 = vsyncpa %s1735, 1
    %1737 = vsyncpa [#allocation7], 1
    %s1738 = scalar_lea.sflag [#allocation7], 1
    %1739 = vsyncpa %s1738, 1
    %1740 = vsyncpa [#allocation10], 1
    %1741 = vsyncpa [#allocation5], 1
    %s1742 = scalar_lea.sflag [#allocation5], 1
    %1743 = vsyncpa %s1742, 1

</llo_original>
